<compile_context>
chip_gen: v6e
topology: v6e:2x2x1
jax: 0.10.0
libtpu: 0.0.40
codegen_flags: <defaults>
</compile_context>

<pallas_src>
import functools
import math

import numpy as np
import jax
import jax.numpy as jnp
from jax.experimental import pallas as pl
from jax.experimental.pallas import tpu as pltpu

LEAKY_SLOPE_SCA = 0.01   # nn.LeakyReLU() default
VN_LEAKY_SLOPE = 0.2     # VNLeakyReLU default
VN_EPS = 1e-6
ROW_ALIGN = 16           # sublane alignment of each slab entry (bf16-safe)


def _round_up(x, m):
    return ((x + m - 1) // m) * m


# ---------------------------------------------------------------------------
# Pure-math reference building blocks (unfused form; used only for the
# plain-JAX reference).  All weights are pre-transposed to (in, out).
# ---------------------------------------------------------------------------
def _gb_linear_ref(sca, vec, Wv1, Ws, Wg, bg, Wv2):
    v_inter = jnp.stack([jnp.dot(vec[k], Wv1) for k in range(3)], axis=0)
    v_norm = jnp.sqrt(jnp.sum(v_inter * v_inter, axis=0))
    sca_cat = jnp.concatenate([v_norm, sca], axis=-1)
    out_sca = jnp.dot(sca_cat, Ws)
    out_vec = jnp.stack([jnp.dot(v_inter[k], Wv2) for k in range(3)], axis=0)
    gate = jax.nn.sigmoid(jnp.dot(out_sca, Wg) + bg)
    return out_sca, gate[None, :, :] * out_vec


def _vn_leaky_relu_ref(vec, Wd):
    d = jnp.stack([jnp.dot(vec[k], Wd) for k in range(3)], axis=0)
    dot = jnp.sum(vec * d, axis=0)
    d_norm_sq = jnp.sum(d * d, axis=0)
    mask = (dot >= 0).astype(vec.dtype)
    proj = vec - (dot / (d_norm_sq + VN_EPS))[None] * d
    return VN_LEAKY_SLOPE * vec + (1.0 - VN_LEAKY_SLOPE) * (
        mask[None] * vec + (1.0 - mask[None]) * proj)


def _forward_math_ref(sca, vec, pos, weights):
    idx = [0]

    def take(n):
        out = weights[idx[0]:idx[0] + n]
        idx[0] += n
        return out

    s, v = _gb_linear_ref(sca, vec, *take(5))        # GBPerceptronVN
    (Wd,) = take(1)
    v = _vn_leaky_relu_ref(v, Wd)
    s = jnp.where(s >= 0, s, LEAKY_SLOPE_SCA * s)
    s, v = _gb_linear_ref(s, v, *take(5))            # GBLinear
    _, relmu = _gb_linear_ref(s, v, *take(5))        # mu_net
    _, logsig = _gb_linear_ref(s, v, *take(5))       # logsigma_net
    pi_logits, _ = _gb_linear_ref(s, v, *take(5))    # pi_net
    sigma = jnp.exp(logsig)
    abs_mu = jnp.stack([relmu[k] + pos[:, k:k + 1] for k in range(3)], axis=0)
    pi = jax.nn.softmax(pi_logits, axis=-1)
    return relmu, abs_mu, sigma, pi


def reference_forward(params, h_sca, h_vec, idx_pivotal, pos_compose, atom_type_emb):
    sca = jnp.concatenate([h_sca[idx_pivotal], atom_type_emb], axis=1)
    vec = jnp.transpose(h_vec[idx_pivotal], (2, 0, 1))
    pos = pos_compose[idx_pivotal]
    flat_w = [w for layer in params for w in layer]
    relmu, abs_mu, sigma, pi = _forward_math_ref(sca, vec, pos, flat_w)
    return (jnp.transpose(relmu, (1, 2, 0)), jnp.transpose(abs_mu, (1, 2, 0)),
            jnp.transpose(sigma, (1, 2, 0)), pi)


# ---------------------------------------------------------------------------
# Weight restructuring: fold Wg into Ws, xyz -> lane axis (block-diag x3),
# fuse heads, pack everything into ONE lane-padded slab.
# ---------------------------------------------------------------------------
def _block_diag(*mats):
    rows = sum(m.shape[0] for m in mats)
    cols = sum(m.shape[1] for m in mats)
    out = jnp.zeros((rows, cols), jnp.float32)
    r = c = 0
    for m in mats:
        out = out.at[r:r + m.shape[0], c:c + m.shape[1]].set(m)
        r += m.shape[0]
        c += m.shape[1]
    return out


def _rep3(w):
    """Block-diag replicate a per-xyz-component weight 3x (lane-axis layout)."""
    return _block_diag(w, w, w)


def _pack_weights(params):
    layer1, layer2, mu_net, ls_net, pi_net = params
    Wv1_1, Ws_1, Wg_1, bg_1, Wv2_1, Wd_1 = layer1
    Wv1_2, Ws_2, Wg_2, bg_2, Wv2_2 = layer2
    Wv1_m, Ws_m, Wg_m, bg_m, Wv2_m = mu_net
    Wv1_l, Ws_l, Wg_l, bg_l, Wv2_l = ls_net
    Wv1_p, Ws_p, Wg_p, bg_p, Wv2_p = pi_net   # Wg_p/bg_p/Wv2_p: dead branch (pi uses scalar out only)

    def gb_entries(prefix, Wv1, Ws, Wg, bg, Wv2):
        H = Wv1.shape[1]
        # concat([v_norm, sca]) @ Ws == v_norm @ Ws[:H] + sca @ Ws[H:]
        # gate logits = out_sca @ Wg + bg  ->  fold Wg:  [Ws | Ws @ Wg]  (f32 precompose)
        wsv = jnp.concatenate([Ws[:H], Ws[:H] @ Wg], axis=1)
        wss = jnp.concatenate([Ws[H:], Ws[H:] @ Wg], axis=1)
        return [
            (prefix + "_wv1", _rep3(Wv1)),
            (prefix + "_wsv", wsv),
            (prefix + "_wss", wss),
            (prefix + "_bg",  bg),
            (prefix + "_wv2", _rep3(Wv2)),
        ]

    # fused heads (mu | logsigma | pi)
    hm, hl, hp = Wv1_m.shape[1], Wv1_l.shape[1], Wv1_p.shape[1]
    nc = int(Ws_m.shape[1])
    assert Ws_l.shape[1] == nc and Ws_p.shape[1] == nc
    assert Wg_m.shape == (nc, nc) and Wg_l.shape == (nc, nc)

    h_wv1 = _rep3(jnp.concatenate([Wv1_m, Wv1_l, Wv1_p], axis=1))
    h_wsv = jnp.concatenate([
        _block_diag(Ws_m[:hm], Ws_l[:hl], Ws_p[:hp]),                   # -> out_sca (3*nc cols)
        jnp.concatenate([_block_diag(Ws_m[:hm] @ Wg_m, Ws_l[:hl] @ Wg_l),
                         jnp.zeros((hp, 2 * nc), jnp.float32)], axis=0),  # -> gate logits (2*nc cols)
    ], axis=1)
    h_wss = jnp.concatenate([Ws_m[hm:], Ws_l[hl:], Ws_p[hp:],
                             Ws_m[hm:] @ Wg_m, Ws_l[hl:] @ Wg_l], axis=1)
    h_bg = jnp.concatenate([bg_m, bg_l], axis=1)
    h_wv2 = _rep3(jnp.concatenate([_block_diag(Wv2_m, Wv2_l),
                                   jnp.zeros((hp, 2 * nc), jnp.float32)], axis=0))

    entries = (gb_entries("l1", Wv1_1, Ws_1, Wg_1, bg_1, Wv2_1)
               + [("l1_wd", _rep3(Wd_1))]
               + gb_entries("l2", Wv1_2, Ws_2, Wg_2, bg_2, Wv2_2)
               + [("h_wv1", h_wv1), ("h_wsv", h_wsv), ("h_wss", h_wss),
                  ("h_bg", h_bg), ("h_wv2", h_wv2)])

    # slab lane width sized from the widest entry (head Wv1 block-diag > 128)
    lane_w = _round_up(max(int(w.shape[1]) for _, w in entries), 128)
    meta, chunks, off = {}, [], 0
    for name, w in entries:
        r, c = int(w.shape[0]), int(w.shape[1])
        assert c <= lane_w and r >= 1, (name, r, c, lane_w)   # no silent clipping
        r_pad = _round_up(r, ROW_ALIGN)
        chunk = jnp.zeros((r_pad, lane_w), jnp.float32).at[:r, :c].set(w)
        chunks.append(chunk)
        meta[name] = (off, r, c)
        off += r_pad
    slab = jnp.concatenate(chunks, axis=0)

    dims = dict(
        in_s=int(Ws_1.shape[0] - Wv1_1.shape[1]),
        in_v3=int(3 * Wv1_1.shape[0]),
        h1=int(Wv1_1.shape[1]), s1=int(Ws_1.shape[1]), v1=int(Wv2_1.shape[1]),
        h2=int(Wv1_2.shape[1]), s2=int(Ws_2.shape[1]), v2=int(Wv2_2.shape[1]),
        hh3=int(hm + hl + hp), nc=nc,
    )
    return slab, meta, dims


# ---------------------------------------------------------------------------
# Pallas kernel (lane-axis layout: every (n, 3*C) tensor is [x | y | z] blocks)
# ---------------------------------------------------------------------------
def _position_predictor_kernel(x_ref, w_ref, out_ref, *, meta, dims, mm_dtype):
    n = x_ref.shape[0]
    nc = dims["nc"]
    f32 = jnp.float32

    def w(name):
        off, r, c = meta[name]
        return w_ref[off:off + r, :c]          # static slice of the packed weight slab

    def mm(a, b):
        return jnp.dot(a.astype(mm_dtype), b.astype(mm_dtype),
                       preferred_element_type=f32)

    def rep3(a):                                # broadcast per-channel value to the 3 xyz lane blocks
        return jnp.concatenate([a, a, a], axis=-1)

    def norm3(a, c):                            # a: (n, 3c) laid out [x | y | z]
        return jnp.sqrt(a[:, :c] * a[:, :c] + a[:, c:2 * c] * a[:, c:2 * c]
                        + a[:, 2 * c:] * a[:, 2 * c:])

    def gb_linear(s, v, p, out_s, h):
        """GBLinear: xyz on the lane axis, Wg pre-folded into Ws (single matmul pair)."""
        vi = mm(v, w(p + "_wv1"))                                   # (n, 3h)
        vn = norm3(vi, h)                                           # (n, h)
        sg = mm(vn, w(p + "_wsv")) + mm(s, w(p + "_wss"))           # (n, out_s + out_v)
        out_sca = sg[:, :out_s]
        gate = jax.nn.sigmoid(sg[:, out_s:] + w(p + "_bg").astype(f32))
        out_vec = mm(vi, w(p + "_wv2")) * rep3(gate)                # (n, 3*out_v)
        return out_sca, out_vec

    def vn_leaky_relu(v, c):
        d = mm(v, w("l1_wd"))                                       # (n, 3c)
        dot = (v[:, :c] * d[:, :c] + v[:, c:2 * c] * d[:, c:2 * c]
               + v[:, 2 * c:] * d[:, 2 * c:])
        dns = (d[:, :c] * d[:, :c] + d[:, c:2 * c] * d[:, c:2 * c]
               + d[:, 2 * c:] * d[:, 2 * c:])
        mask = (dot >= 0).astype(f32)
        proj = v - rep3(dot / (dns + VN_EPS)) * d
        keep = rep3(mask)
        return VN_LEAKY_SLOPE * v + (1.0 - VN_LEAKY_SLOPE) * (
            keep * v + (1.0 - keep) * proj)

    x = x_ref[...]                              # native dtype (no entry upcast in the bf16 path)
    s = x[:, :dims["in_s"]]
    v = x[:, dims["in_s"]:dims["in_s"] + dims["in_v3"]]

    # gvp[0] = GBPerceptronVN
    s, v = gb_linear(s, v, "l1", dims["s1"], dims["h1"])
    v = vn_leaky_relu(v, dims["v1"])
    s = jnp.where(s >= 0, s, LEAKY_SLOPE_SCA * s)
    # gvp[1] = GBLinear
    s, v = gb_linear(s, v, "l2", dims["s2"], dims["h2"])

    # fused heads: mu / logsigma / pi (pi's gated vector branch is dead -> dropped)
    hh3 = dims["hh3"]
    vi = mm(v, w("h_wv1"))                                          # (n, 3*hh3)
    vn = norm3(vi, hh3)                                             # (n, hh3)
    sg = mm(vn, w("h_wsv")) + mm(s, w("h_wss"))                     # (n, 5*nc)
    out_sca = sg[:, :3 * nc]                                        # [mu | logsigma | pi] scalars
    gate = jax.nn.sigmoid(sg[:, 3 * nc:] + w("h_bg").astype(f32))   # (n, 2*nc)
    out_vec = mm(vi, w("h_wv2")) * rep3(gate)                       # (n, 6*nc) [x:(mu|ls)|y|z]

    # sigma = exp(logsigma) on the ls lane slots only
    lane = jax.lax.broadcasted_iota(jnp.int32, out_vec.shape, 1)
    musig = jnp.where((lane % (2 * nc)) >= nc, jnp.exp(out_vec), out_vec)
    pi = jax.nn.softmax(out_sca[:, 2 * nc:], axis=-1)               # (n, nc)

    # lane-dense (>=128-wide) packed output: [x:(mu,sigma) | y | z | pi | 0-pad]
    pad = out_ref.shape[1] - 7 * nc
    parts = [musig, pi]
    if pad:
        parts.append(jnp.zeros((n, pad), f32))
    out_ref[...] = jnp.concatenate(parts, axis=-1)


# ---------------------------------------------------------------------------
# Wrapper
# ---------------------------------------------------------------------------
def _choose_tile(n, max_tile=512, align=32):
    """>= 4 grid steps (even count for v7x's 2 cores), tile <= max_tile (VMEM-safe
    on v7x 64 MiB), rows aligned to 32 (covers f32 and bf16 sublane packing)."""
    steps = max(4, -(-n // max_tile))
    steps = _round_up(steps, 2)
    tile = _round_up(-(-n // steps), align)
    return max(align, min(max_tile, tile))


def position_predictor_forward(params, h_sca, h_vec, idx_pivotal, pos_compose,
                               atom_type_emb, n_component, *,
                               tile_n=None, mm_dtype=jnp.float32):
    # Glue: gather pivotal nodes, concat atom-type embedding, lane-pack activations.
    sca = jnp.concatenate([h_sca[idx_pivotal], atom_type_emb], axis=1)   # (N, 2*in_sca)
    vec = h_vec[idx_pivotal]                                             # (N, in_vec, 3)
    pos = pos_compose[idx_pivotal]                                       # (N, 3)
    n, in_s = sca.shape
    in_v = vec.shape[1]

    w_slab, meta, dims = _pack_weights(params)
    nc = dims["nc"]
    assert nc == n_component
    assert dims["in_s"] == in_s and dims["in_v3"] == 3 * in_v

    # ONE lane-packed activation slab: [sca | vec_x | vec_y | vec_z] (+ lane pad)
    vec_lane = jnp.transpose(vec, (0, 2, 1)).reshape(n, 3 * in_v)
    x = jnp.concatenate([sca, vec_lane], axis=1)
    x_w = _round_up(x.shape[1], 64)
    if x_w != x.shape[1]:
        x = jnp.pad(x, ((0, 0), (0, x_w - x.shape[1])))

    if tile_n is None:
        tile_n = _choose_tile(n)
    tile_n = _round_up(tile_n, 16 if mm_dtype != jnp.float32 else 8)
    n_pad = _round_up(n, tile_n)
    if n_pad != n:
        x = jnp.pad(x, ((0, n_pad - n), (0, 0)))

    if mm_dtype != jnp.float32:
        # bf16 MXU operands (v6e/v7x); accumulation + elementwise stay f32 in-kernel.
        x = x.astype(mm_dtype)
        w_slab = w_slab.astype(mm_dtype)

    out_w = _round_up(7 * nc, 128)          # lane-dense output slab
    kernel = functools.partial(_position_predictor_kernel,
                               meta=meta, dims=dims, mm_dtype=mm_dtype)

    packed = pl.pallas_call(
        kernel,
        out_shape=jax.ShapeDtypeStruct((n_pad, out_w), jnp.float32),
        grid_spec=pltpu.PrefetchScalarGridSpec(
            num_scalar_prefetch=0,
            grid=(n_pad // tile_n,),
            in_specs=[
                pl.BlockSpec((tile_n, x_w), lambda i: (i, 0)),
                pl.BlockSpec(w_slab.shape, lambda i: (0, 0)),   # constant weight slab
            ],
            out_specs=pl.BlockSpec((tile_n, out_w), lambda i: (i, 0)),
        ),
        compiler_params=pltpu.CompilerParams(
            dimension_semantics=("parallel",)),
    )(x, w_slab)

    # Unpack in the wrapper (trivial XLA ops), drop padding rows.
    packed = packed[:n]
    blk = packed[:, :6 * nc].reshape(n, 3, 2 * nc)
    relative_mu = jnp.transpose(blk[:, :, :nc], (0, 2, 1))   # (N, nc, 3)
    sigma = jnp.transpose(blk[:, :, nc:], (0, 2, 1))         # (N, nc, 3)
    pi = packed[:, 6 * nc:7 * nc]                            # (N, nc)
    abs_mu = relative_mu + pos[:, None, :]
    return relative_mu, abs_mu, sigma, pi


# ---------------------------------------------------------------------------
# Deterministic parameter init (synthetic; matches reconstructed layer shapes)
# ---------------------------------------------------------------------------
def init_gb_linear(key, in_s, in_v, out_s, out_v, bottleneck=1):
    dim_hid = max(in_v, out_v) // bottleneck
    ks = jax.random.split(key, 4)

    def lin(k, fan_in, shape):
        b = 1.0 / math.sqrt(fan_in)
        return jax.random.uniform(k, shape, jnp.float32, -b, b)

    Wv1 = lin(ks[0], in_v, (in_v, dim_hid))
    Ws = lin(ks[1], in_s + dim_hid, (dim_hid + in_s, out_s))
    Wg = lin(ks[2], out_s, (out_s, out_v))
    bg = jnp.zeros((1, out_v), jnp.float32)
    Wv2 = lin(ks[3], dim_hid, (dim_hid, out_v))
    return [Wv1, Ws, Wg, bg, Wv2]


def init_position_predictor(key, in_sca, in_vec, num_filters, n_component,
                            bottleneck=1):
    nf_s, nf_v = num_filters
    ks = jax.random.split(key, 6)
    layer1 = init_gb_linear(ks[0], in_sca * 2, in_vec, nf_s, nf_v, bottleneck)
    b = 1.0 / math.sqrt(nf_v)
    layer1.append(jax.random.uniform(ks[1], (nf_v, nf_v), jnp.float32, -b, b))
    layer2 = init_gb_linear(ks[2], nf_s, nf_v, nf_s, nf_v, bottleneck)
    mu_net = init_gb_linear(ks[3], nf_s, nf_v, n_component, n_component, bottleneck)
    logsigma_net = init_gb_linear(ks[4], nf_s, nf_v, n_component, n_component, bottleneck)
    pi_net = init_gb_linear(ks[5], nf_s, nf_v, n_component, 1, bottleneck)
    return [layer1, layer2, mu_net, logsigma_net, pi_net]


# ---------------------------------------------------------------------------
if __name__ == "__main__":
    IN_SCA, IN_VEC = 16, 8
    NUM_FILTERS = (32, 16)
    N_COMPONENT = 4
    N_ALL, N_PIVOTAL = 64, 37   # non-multiple-of-tile pivotal count exercises padding

    key = jax.random.PRNGKey(0)
    keys = jax.random.split(key, 6)
    h_sca = jax.random.normal(keys[0], (N_ALL, IN_SCA), jnp.float32)
    h_vec = jax.random.normal(keys[1], (N_ALL, IN_VEC, 3), jnp.float32)
    pos_compose = jax.random.normal(keys[2], (N_ALL, 3), jnp.float32)
    idx_pivotal = jax.random.randint(keys[3], (N_PIVOTAL,), 0, N_ALL)
    atom_type_emb = jax.random.normal(keys[4], (N_PIVOTAL, IN_SCA), jnp.float32)

    params = init_position_predictor(keys[5], IN_SCA, IN_VEC, NUM_FILTERS, N_COMPONENT)

    refs = reference_forward(params, h_sca, h_vec, idx_pivotal, pos_compose, atom_type_emb)
    names = ["relative_mu", "abs_mu", "sigma", "pi"]

    # f32 MXU run (safe on all generations) vs pure-JAX reference.
    outs = position_predictor_forward(
        params, h_sca, h_vec, idx_pivotal, pos_compose, atom_type_emb, N_COMPONENT)
    outs = jax.block_until_ready(outs)
    for name, a, b in zip(names, outs, refs):
        np.testing.assert_allclose(np.asarray(a), np.asarray(b),
                                   rtol=5e-3, atol=5e-3, err_msg=name)

    # bf16-MXU variant (recommended on v6e/v7x): loose-tolerance accuracy check.
    outs_bf16 = position_predictor_forward(
        params, h_sca, h_vec, idx_pivotal, pos_compose, atom_type_emb, N_COMPONENT,
        mm_dtype=jnp.bfloat16)
    outs_bf16 = jax.block_until_ready(outs_bf16)
    for name, a, b in zip(names, outs_bf16, refs):
        assert a.shape == b.shape, name
        assert bool(jnp.all(jnp.isfinite(a))), name
        np.testing.assert_allclose(np.asarray(a), np.asarray(b),
                                   rtol=2e-1, atol=2e-1, err_msg=name + " (bf16)")

    # TODO(synk): sample_batch (torch.multinomial/normal) and get_mdn_probability
    # are not part of forward() and are not implemented here.
    print("KERNEL_OK")
</pallas_src>

<mosaic_0001>
module attributes {stable_mosaic.version = 11 : i64} {
  func.func @_position_predictor_kernel(%arg0: i32, %arg1: memref<32x64xf32, #tpu.memory_space<vmem>>, %arg2: memref<640x256xf32, #tpu.memory_space<vmem>>, %arg3: memref<32x128xf32, #tpu.memory_space<vmem>>) attributes {dimension_semantics = [#tpu.dimension_semantics<parallel>], iteration_bounds = array<i64: 2>, scalar_prefetch = 0 : i64, scratch_operands = 0 : i64, tpu.core_type = #tpu.core_type<tc>, window_params = [{transform_indices = @transform_0, window_bounds = array<i64: 32, 64>}, {pipeline_mode = #tpu.pipeline_mode<synchronous>, transform_indices = @transform_1, window_bounds = array<i64: 640, 256>}, {transform_indices = @transform_2, window_bounds = array<i64: 32, 128>}]} {
    %c0 = arith.constant 0 : index
    %c0_0 = arith.constant 0 : index
    %0 = vector.load %arg1[%c0, %c0_0] : memref<32x64xf32, #tpu.memory_space<vmem>>, vector<32x64xf32>
    %1 = vector.extract_strided_slice %0 {offsets = [0, 0], sizes = [32, 32], strides = [1, 1]} : vector<32x64xf32> to vector<32x32xf32>
    %2 = vector.extract_strided_slice %0 {offsets = [0, 32], sizes = [32, 24], strides = [1, 1]} : vector<32x64xf32> to vector<32x24xf32>
    %c0_1 = arith.constant 0 : index
    %c0_2 = arith.constant 0 : index
    %3 = vector.load %arg2[%c0_1, %c0_2] : memref<640x256xf32, #tpu.memory_space<vmem>>, vector<24x48xf32>
    %cst = arith.constant dense<0.000000e+00> : vector<32x48xf32>
    %4 = tpu.matmul %2, %3, %cst {dimension_numbers = #tpu.dot_dimension_numbers<[1], [0], [0], [1], [0, 0, 1, 1], [], []>} : vector<32x24xf32>, vector<24x48xf32>, vector<32x48xf32> -> vector<32x48xf32>
    %5 = vector.extract_strided_slice %4 {offsets = [0, 0], sizes = [32, 16], strides = [1, 1]} : vector<32x48xf32> to vector<32x16xf32>
    %6 = vector.extract_strided_slice %4 {offsets = [0, 0], sizes = [32, 16], strides = [1, 1]} : vector<32x48xf32> to vector<32x16xf32>
    %7 = arith.mulf %5, %6 : vector<32x16xf32>
    %8 = vector.extract_strided_slice %4 {offsets = [0, 16], sizes = [32, 16], strides = [1, 1]} : vector<32x48xf32> to vector<32x16xf32>
    %9 = vector.extract_strided_slice %4 {offsets = [0, 16], sizes = [32, 16], strides = [1, 1]} : vector<32x48xf32> to vector<32x16xf32>
    %10 = arith.mulf %8, %9 : vector<32x16xf32>
    %11 = arith.addf %7, %10 : vector<32x16xf32>
    %12 = vector.extract_strided_slice %4 {offsets = [0, 32], sizes = [32, 16], strides = [1, 1]} : vector<32x48xf32> to vector<32x16xf32>
    %13 = vector.extract_strided_slice %4 {offsets = [0, 32], sizes = [32, 16], strides = [1, 1]} : vector<32x48xf32> to vector<32x16xf32>
    %14 = arith.mulf %12, %13 : vector<32x16xf32>
    %15 = arith.addf %11, %14 : vector<32x16xf32>
    %16 = math.sqrt %15 : vector<32x16xf32>
    %c32 = arith.constant 32 : index
    %c0_3 = arith.constant 0 : index
    %17 = vector.load %arg2[%c32, %c0_3] : memref<640x256xf32, #tpu.memory_space<vmem>>, vector<16x48xf32>
    %cst_4 = arith.constant dense<0.000000e+00> : vector<32x48xf32>
    %18 = tpu.matmul %16, %17, %cst_4 {dimension_numbers = #tpu.dot_dimension_numbers<[1], [0], [0], [1], [0, 0, 1, 1], [], []>} : vector<32x16xf32>, vector<16x48xf32>, vector<32x48xf32> -> vector<32x48xf32>
    %c48 = arith.constant 48 : index
    %c0_5 = arith.constant 0 : index
    %19 = vector.load %arg2[%c48, %c0_5] : memref<640x256xf32, #tpu.memory_space<vmem>>, vector<32x48xf32>
    %cst_6 = arith.constant dense<0.000000e+00> : vector<32x48xf32>
    %20 = tpu.matmul %1, %19, %cst_6 {dimension_numbers = #tpu.dot_dimension_numbers<[1], [0], [0], [1], [0, 0, 1, 1], [], []>} : vector<32x32xf32>, vector<32x48xf32>, vector<32x48xf32> -> vector<32x48xf32>
    %21 = arith.addf %18, %20 : vector<32x48xf32>
    %22 = vector.extract_strided_slice %21 {offsets = [0, 0], sizes = [32, 32], strides = [1, 1]} : vector<32x48xf32> to vector<32x32xf32>
    %23 = vector.extract_strided_slice %21 {offsets = [0, 32], sizes = [32, 16], strides = [1, 1]} : vector<32x48xf32> to vector<32x16xf32>
    %c80 = arith.constant 80 : index
    %c0_7 = arith.constant 0 : index
    %24 = vector.load %arg2[%c80, %c0_7] : memref<640x256xf32, #tpu.memory_space<vmem>>, vector<1x16xf32>
    %25 = vector.broadcast %24 : vector<1x16xf32> to vector<32x16xf32>
    %26 = arith.addf %23, %25 : vector<32x16xf32>
    %27 = arith.negf %26 : vector<32x16xf32>
    %28 = math.exp %27 : vector<32x16xf32>
    %cst_8 = arith.constant 1.000000e+00 : f32
    %29 = vector.broadcast %cst_8 : f32 to vector<32x16xf32>
    %30 = arith.addf %29, %28 : vector<32x16xf32>
    %31 = arith.divf %29, %30 : vector<32x16xf32>
    %c96 = arith.constant 96 : index
    %c0_9 = arith.constant 0 : index
    %32 = vector.load %arg2[%c96, %c0_9] : memref<640x256xf32, #tpu.memory_space<vmem>>, vector<48x48xf32>
    %cst_10 = arith.constant dense<0.000000e+00> : vector<32x48xf32>
    %33 = tpu.matmul %4, %32, %cst_10 {dimension_numbers = #tpu.dot_dimension_numbers<[1], [0], [0], [1], [0, 0, 1, 1], [], []>} : vector<32x48xf32>, vector<48x48xf32>, vector<32x48xf32> -> vector<32x48xf32>
    %34 = tpu.concatenate %31, %31, %31 in 1 : vector<32x16xf32>, vector<32x16xf32>, vector<32x16xf32> -> vector<32x48xf32>
    %35 = arith.mulf %33, %34 : vector<32x48xf32>
    %c144 = arith.constant 144 : index
    %c0_11 = arith.constant 0 : index
    %36 = vector.load %arg2[%c144, %c0_11] : memref<640x256xf32, #tpu.memory_space<vmem>>, vector<48x48xf32>
    %cst_12 = arith.constant dense<0.000000e+00> : vector<32x48xf32>
    %37 = tpu.matmul %35, %36, %cst_12 {dimension_numbers = #tpu.dot_dimension_numbers<[1], [0], [0], [1], [0, 0, 1, 1], [], []>} : vector<32x48xf32>, vector<48x48xf32>, vector<32x48xf32> -> vector<32x48xf32>
    %38 = vector.extract_strided_slice %35 {offsets = [0, 0], sizes = [32, 16], strides = [1, 1]} : vector<32x48xf32> to vector<32x16xf32>
    %39 = vector.extract_strided_slice %37 {offsets = [0, 0], sizes = [32, 16], strides = [1, 1]} : vector<32x48xf32> to vector<32x16xf32>
    %40 = arith.mulf %38, %39 : vector<32x16xf32>
    %41 = vector.extract_strided_slice %35 {offsets = [0, 16], sizes = [32, 16], strides = [1, 1]} : vector<32x48xf32> to vector<32x16xf32>
    %42 = vector.extract_strided_slice %37 {offsets = [0, 16], sizes = [32, 16], strides = [1, 1]} : vector<32x48xf32> to vector<32x16xf32>
    %43 = arith.mulf %41, %42 : vector<32x16xf32>
    %44 = arith.addf %40, %43 : vector<32x16xf32>
    %45 = vector.extract_strided_slice %35 {offsets = [0, 32], sizes = [32, 16], strides = [1, 1]} : vector<32x48xf32> to vector<32x16xf32>
    %46 = vector.extract_strided_slice %37 {offsets = [0, 32], sizes = [32, 16], strides = [1, 1]} : vector<32x48xf32> to vector<32x16xf32>
    %47 = arith.mulf %45, %46 : vector<32x16xf32>
    %48 = arith.addf %44, %47 : vector<32x16xf32>
    %49 = vector.extract_strided_slice %37 {offsets = [0, 0], sizes = [32, 16], strides = [1, 1]} : vector<32x48xf32> to vector<32x16xf32>
    %50 = vector.extract_strided_slice %37 {offsets = [0, 0], sizes = [32, 16], strides = [1, 1]} : vector<32x48xf32> to vector<32x16xf32>
    %51 = arith.mulf %49, %50 : vector<32x16xf32>
    %52 = vector.extract_strided_slice %37 {offsets = [0, 16], sizes = [32, 16], strides = [1, 1]} : vector<32x48xf32> to vector<32x16xf32>
    %53 = vector.extract_strided_slice %37 {offsets = [0, 16], sizes = [32, 16], strides = [1, 1]} : vector<32x48xf32> to vector<32x16xf32>
    %54 = arith.mulf %52, %53 : vector<32x16xf32>
    %55 = arith.addf %51, %54 : vector<32x16xf32>
    %56 = vector.extract_strided_slice %37 {offsets = [0, 32], sizes = [32, 16], strides = [1, 1]} : vector<32x48xf32> to vector<32x16xf32>
    %57 = vector.extract_strided_slice %37 {offsets = [0, 32], sizes = [32, 16], strides = [1, 1]} : vector<32x48xf32> to vector<32x16xf32>
    %58 = arith.mulf %56, %57 : vector<32x16xf32>
    %59 = arith.addf %55, %58 : vector<32x16xf32>
    %cst_13 = arith.constant 0.000000e+00 : f32
    %60 = vector.broadcast %cst_13 : f32 to vector<32x16xf32>
    %61 = arith.cmpf oge, %48, %60 : vector<32x16xf32>
    %62 = arith.extui %61 : vector<32x16xi1> to vector<32x16xi32>
    %63 = arith.sitofp %62 : vector<32x16xi32> to vector<32x16xf32>
    %cst_14 = arith.constant 9.99999997E-7 : f32
    %64 = vector.broadcast %cst_14 : f32 to vector<32x16xf32>
    %65 = arith.addf %59, %64 : vector<32x16xf32>
    %66 = arith.divf %48, %65 : vector<32x16xf32>
    %67 = tpu.concatenate %66, %66, %66 in 1 : vector<32x16xf32>, vector<32x16xf32>, vector<32x16xf32> -> vector<32x48xf32>
    %68 = arith.mulf %67, %37 : vector<32x48xf32>
    %69 = arith.subf %35, %68 : vector<32x48xf32>
    %70 = tpu.concatenate %63, %63, %63 in 1 : vector<32x16xf32>, vector<32x16xf32>, vector<32x16xf32> -> vector<32x48xf32>
    %cst_15 = arith.constant 2.000000e-01 : f32
    %71 = vector.broadcast %cst_15 : f32 to vector<32x48xf32>
    %72 = arith.mulf %71, %35 : vector<32x48xf32>
    %73 = arith.mulf %70, %35 : vector<32x48xf32>
    %cst_16 = arith.constant 1.000000e+00 : f32
    %74 = vector.broadcast %cst_16 : f32 to vector<32x48xf32>
    %75 = arith.subf %74, %70 : vector<32x48xf32>
    %76 = arith.mulf %75, %69 : vector<32x48xf32>
    %77 = arith.addf %73, %76 : vector<32x48xf32>
    %cst_17 = arith.constant 8.000000e-01 : f32
    %78 = vector.broadcast %cst_17 : f32 to vector<32x48xf32>
    %79 = arith.mulf %78, %77 : vector<32x48xf32>
    %80 = arith.addf %72, %79 : vector<32x48xf32>
    %cst_18 = arith.constant 0.000000e+00 : f32
    %81 = vector.broadcast %cst_18 : f32 to vector<32x32xf32>
    %82 = arith.cmpf oge, %22, %81 : vector<32x32xf32>
    %cst_19 = arith.constant 0.00999999977 : f32
    %83 = vector.broadcast %cst_19 : f32 to vector<32x32xf32>
    %84 = arith.mulf %83, %22 : vector<32x32xf32>
    %85 = arith.select %82, %22, %84 : vector<32x32xi1>, vector<32x32xf32>
    %c192 = arith.constant 192 : index
    %c0_20 = arith.constant 0 : index
    %86 = vector.load %arg2[%c192, %c0_20] : memref<640x256xf32, #tpu.memory_space<vmem>>, vector<48x48xf32>
    %cst_21 = arith.constant dense<0.000000e+00> : vector<32x48xf32>
    %87 = tpu.matmul %80, %86, %cst_21 {dimension_numbers = #tpu.dot_dimension_numbers<[1], [0], [0], [1], [0, 0, 1, 1], [], []>} : vector<32x48xf32>, vector<48x48xf32>, vector<32x48xf32> -> vector<32x48xf32>
    %88 = vector.extract_strided_slice %87 {offsets = [0, 0], sizes = [32, 16], strides = [1, 1]} : vector<32x48xf32> to vector<32x16xf32>
    %89 = vector.extract_strided_slice %87 {offsets = [0, 0], sizes = [32, 16], strides = [1, 1]} : vector<32x48xf32> to vector<32x16xf32>
    %90 = arith.mulf %88, %89 : vector<32x16xf32>
    %91 = vector.extract_strided_slice %87 {offsets = [0, 16], sizes = [32, 16], strides = [1, 1]} : vector<32x48xf32> to vector<32x16xf32>
    %92 = vector.extract_strided_slice %87 {offsets = [0, 16], sizes = [32, 16], strides = [1, 1]} : vector<32x48xf32> to vector<32x16xf32>
    %93 = arith.mulf %91, %92 : vector<32x16xf32>
    %94 = arith.addf %90, %93 : vector<32x16xf32>
    %95 = vector.extract_strided_slice %87 {offsets = [0, 32], sizes = [32, 16], strides = [1, 1]} : vector<32x48xf32> to vector<32x16xf32>
    %96 = vector.extract_strided_slice %87 {offsets = [0, 32], sizes = [32, 16], strides = [1, 1]} : vector<32x48xf32> to vector<32x16xf32>
    %97 = arith.mulf %95, %96 : vector<32x16xf32>
    %98 = arith.addf %94, %97 : vector<32x16xf32>
    %99 = math.sqrt %98 : vector<32x16xf32>
    %c240 = arith.constant 240 : index
    %c0_22 = arith.constant 0 : index
    %100 = vector.load %arg2[%c240, %c0_22] : memref<640x256xf32, #tpu.memory_space<vmem>>, vector<16x48xf32>
    %cst_23 = arith.constant dense<0.000000e+00> : vector<32x48xf32>
    %101 = tpu.matmul %99, %100, %cst_23 {dimension_numbers = #tpu.dot_dimension_numbers<[1], [0], [0], [1], [0, 0, 1, 1], [], []>} : vector<32x16xf32>, vector<16x48xf32>, vector<32x48xf32> -> vector<32x48xf32>
    %c256 = arith.constant 256 : index
    %c0_24 = arith.constant 0 : index
    %102 = vector.load %arg2[%c256, %c0_24] : memref<640x256xf32, #tpu.memory_space<vmem>>, vector<32x48xf32>
    %cst_25 = arith.constant dense<0.000000e+00> : vector<32x48xf32>
    %103 = tpu.matmul %85, %102, %cst_25 {dimension_numbers = #tpu.dot_dimension_numbers<[1], [0], [0], [1], [0, 0, 1, 1], [], []>} : vector<32x32xf32>, vector<32x48xf32>, vector<32x48xf32> -> vector<32x48xf32>
    %104 = arith.addf %101, %103 : vector<32x48xf32>
    %105 = vector.extract_strided_slice %104 {offsets = [0, 0], sizes = [32, 32], strides = [1, 1]} : vector<32x48xf32> to vector<32x32xf32>
    %106 = vector.extract_strided_slice %104 {offsets = [0, 32], sizes = [32, 16], strides = [1, 1]} : vector<32x48xf32> to vector<32x16xf32>
    %c288 = arith.constant 288 : index
    %c0_26 = arith.constant 0 : index
    %107 = vector.load %arg2[%c288, %c0_26] : memref<640x256xf32, #tpu.memory_space<vmem>>, vector<1x16xf32>
    %108 = vector.broadcast %107 : vector<1x16xf32> to vector<32x16xf32>
    %109 = arith.addf %106, %108 : vector<32x16xf32>
    %110 = arith.negf %109 : vector<32x16xf32>
    %111 = math.exp %110 : vector<32x16xf32>
    %cst_27 = arith.constant 1.000000e+00 : f32
    %112 = vector.broadcast %cst_27 : f32 to vector<32x16xf32>
    %113 = arith.addf %112, %111 : vector<32x16xf32>
    %114 = arith.divf %112, %113 : vector<32x16xf32>
    %c304 = arith.constant 304 : index
    %c0_28 = arith.constant 0 : index
    %115 = vector.load %arg2[%c304, %c0_28] : memref<640x256xf32, #tpu.memory_space<vmem>>, vector<48x48xf32>
    %cst_29 = arith.constant dense<0.000000e+00> : vector<32x48xf32>
    %116 = tpu.matmul %87, %115, %cst_29 {dimension_numbers = #tpu.dot_dimension_numbers<[1], [0], [0], [1], [0, 0, 1, 1], [], []>} : vector<32x48xf32>, vector<48x48xf32>, vector<32x48xf32> -> vector<32x48xf32>
    %117 = tpu.concatenate %114, %114, %114 in 1 : vector<32x16xf32>, vector<32x16xf32>, vector<32x16xf32> -> vector<32x48xf32>
    %118 = arith.mulf %116, %117 : vector<32x48xf32>
    %c352 = arith.constant 352 : index
    %c0_30 = arith.constant 0 : index
    %119 = vector.load %arg2[%c352, %c0_30] : memref<640x256xf32, #tpu.memory_space<vmem>>, vector<48x144xf32>
    %cst_31 = arith.constant dense<0.000000e+00> : vector<32x144xf32>
    %120 = tpu.matmul %118, %119, %cst_31 {dimension_numbers = #tpu.dot_dimension_numbers<[1], [0], [0], [1], [0, 0, 1, 1], [], []>} : vector<32x48xf32>, vector<48x144xf32>, vector<32x144xf32> -> vector<32x144xf32>
    %121 = vector.extract_strided_slice %120 {offsets = [0, 0], sizes = [32, 48], strides = [1, 1]} : vector<32x144xf32> to vector<32x48xf32>
    %122 = vector.extract_strided_slice %120 {offsets = [0, 0], sizes = [32, 48], strides = [1, 1]} : vector<32x144xf32> to vector<32x48xf32>
    %123 = arith.mulf %121, %122 : vector<32x48xf32>
    %124 = vector.extract_strided_slice %120 {offsets = [0, 48], sizes = [32, 48], strides = [1, 1]} : vector<32x144xf32> to vector<32x48xf32>
    %125 = vector.extract_strided_slice %120 {offsets = [0, 48], sizes = [32, 48], strides = [1, 1]} : vector<32x144xf32> to vector<32x48xf32>
    %126 = arith.mulf %124, %125 : vector<32x48xf32>
    %127 = arith.addf %123, %126 : vector<32x48xf32>
    %128 = vector.extract_strided_slice %120 {offsets = [0, 96], sizes = [32, 48], strides = [1, 1]} : vector<32x144xf32> to vector<32x48xf32>
    %129 = vector.extract_strided_slice %120 {offsets = [0, 96], sizes = [32, 48], strides = [1, 1]} : vector<32x144xf32> to vector<32x48xf32>
    %130 = arith.mulf %128, %129 : vector<32x48xf32>
    %131 = arith.addf %127, %130 : vector<32x48xf32>
    %132 = math.sqrt %131 : vector<32x48xf32>
    %c400 = arith.constant 400 : index
    %c0_32 = arith.constant 0 : index
    %133 = vector.load %arg2[%c400, %c0_32] : memref<640x256xf32, #tpu.memory_space<vmem>>, vector<48x20xf32>
    %cst_33 = arith.constant dense<0.000000e+00> : vector<32x20xf32>
    %134 = tpu.matmul %132, %133, %cst_33 {dimension_numbers = #tpu.dot_dimension_numbers<[1], [0], [0], [1], [0, 0, 1, 1], [], []>} : vector<32x48xf32>, vector<48x20xf32>, vector<32x20xf32> -> vector<32x20xf32>
    %c448 = arith.constant 448 : index
    %c0_34 = arith.constant 0 : index
    %135 = vector.load %arg2[%c448, %c0_34] : memref<640x256xf32, #tpu.memory_space<vmem>>, vector<32x20xf32>
    %cst_35 = arith.constant dense<0.000000e+00> : vector<32x20xf32>
    %136 = tpu.matmul %105, %135, %cst_35 {dimension_numbers = #tpu.dot_dimension_numbers<[1], [0], [0], [1], [0, 0, 1, 1], [], []>} : vector<32x32xf32>, vector<32x20xf32>, vector<32x20xf32> -> vector<32x20xf32>
    %137 = arith.addf %134, %136 : vector<32x20xf32>
    %138 = vector.extract_strided_slice %137 {offsets = [0, 0], sizes = [32, 12], strides = [1, 1]} : vector<32x20xf32> to vector<32x12xf32>
    %139 = vector.extract_strided_slice %137 {offsets = [0, 12], sizes = [32, 8], strides = [1, 1]} : vector<32x20xf32> to vector<32x8xf32>
    %c480 = arith.constant 480 : index
    %c0_36 = arith.constant 0 : index
    %140 = vector.load %arg2[%c480, %c0_36] : memref<640x256xf32, #tpu.memory_space<vmem>>, vector<1x8xf32>
    %141 = vector.broadcast %140 : vector<1x8xf32> to vector<32x8xf32>
    %142 = arith.addf %139, %141 : vector<32x8xf32>
    %143 = arith.negf %142 : vector<32x8xf32>
    %144 = math.exp %143 : vector<32x8xf32>
    %cst_37 = arith.constant 1.000000e+00 : f32
    %145 = vector.broadcast %cst_37 : f32 to vector<32x8xf32>
    %146 = arith.addf %145, %144 : vector<32x8xf32>
    %147 = arith.divf %145, %146 : vector<32x8xf32>
    %c496 = arith.constant 496 : index
    %c0_38 = arith.constant 0 : index
    %148 = vector.load %arg2[%c496, %c0_38] : memref<640x256xf32, #tpu.memory_space<vmem>>, vector<144x24xf32>
    %cst_39 = arith.constant dense<0.000000e+00> : vector<32x24xf32>
    %149 = tpu.matmul %120, %148, %cst_39 {dimension_numbers = #tpu.dot_dimension_numbers<[1], [0], [0], [1], [0, 0, 1, 1], [], []>} : vector<32x144xf32>, vector<144x24xf32>, vector<32x24xf32> -> vector<32x24xf32>
    %150 = tpu.concatenate %147, %147, %147 in 1 : vector<32x8xf32>, vector<32x8xf32>, vector<32x8xf32> -> vector<32x24xf32>
    %151 = arith.mulf %149, %150 : vector<32x24xf32>
    %152 = tpu.iota {dimensions = array<i32: 1>} : vector<32x24xi32>
    %c8_i32 = arith.constant 8 : i32
    %c0_i32 = arith.constant 0 : i32
    %153 = arith.cmpi eq, %c8_i32, %c0_i32 : i32
    %c1_i32 = arith.constant 1 : i32
    %154 = arith.select %153, %c1_i32, %c8_i32 : i32
    %155 = vector.broadcast %154 : i32 to vector<32x24xi32>
    %156 = arith.remsi %152, %155 : vector<32x24xi32>
    %c0_i32_40 = arith.constant 0 : i32
    %157 = vector.broadcast %c0_i32_40 : i32 to vector<32x24xi32>
    %158 = arith.cmpi ne, %156, %157 : vector<32x24xi32>
    %c0_i32_41 = arith.constant 0 : i32
    %159 = vector.broadcast %c0_i32_41 : i32 to vector<32x24xi32>
    %160 = arith.cmpi slt, %156, %159 : vector<32x24xi32>
    %c0_i32_42 = arith.constant 0 : i32
    %161 = arith.cmpi slt, %154, %c0_i32_42 : i32
    %162 = vector.broadcast %161 : i1 to vector<32x24xi1>
    %163 = vector.broadcast %162 : vector<32x24xi1> to vector<32x24xi1>
    %164 = arith.xori %160, %163 : vector<32x24xi1>
    %165 = arith.andi %164, %158 : vector<32x24xi1>
    %166 = vector.broadcast %154 : i32 to vector<32x24xi32>
    %167 = arith.addi %156, %166 : vector<32x24xi32>
    %168 = arith.select %165, %167, %156 : vector<32x24xi1>, vector<32x24xi32>
    %c4_i32 = arith.constant 4 : i32
    %169 = vector.broadcast %c4_i32 : i32 to vector<32x24xi32>
    %170 = arith.cmpi sge, %168, %169 : vector<32x24xi32>
    %171 = math.exp %151 : vector<32x24xf32>
    %172 = arith.select %170, %171, %151 : vector<32x24xi1>, vector<32x24xf32>
    %173 = vector.extract_strided_slice %138 {offsets = [0, 8], sizes = [32, 4], strides = [1, 1]} : vector<32x12xf32> to vector<32x4xf32>
    %cst_43 = arith.constant dense<0xFF800000> : vector<32xf32>
    %174 = vector.multi_reduction <maximumf>, %173, %cst_43 [1] : vector<32x4xf32> to vector<32xf32>
    %cst_44 = arith.constant 0xFF800000 : f32
    %175 = vector.broadcast %cst_44 : f32 to vector<32xf32>
    %176 = arith.maximumf %175, %174 : vector<32xf32>
    %177 = vector.shape_cast %176 : vector<32xf32> to vector<32x1xf32>
    %178 = vector.broadcast %177 : vector<32x1xf32> to vector<32x4xf32>
    %179 = arith.subf %173, %178 : vector<32x4xf32>
    %180 = math.exp %179 : vector<32x4xf32>
    %cst_45 = arith.constant dense<0.000000e+00> : vector<32xf32>
    %181 = vector.multi_reduction <add>, %180, %cst_45 [1] : vector<32x4xf32> to vector<32xf32>
    %182 = vector.shape_cast %181 : vector<32xf32> to vector<32x1xf32>
    %183 = vector.broadcast %182 : vector<32x1xf32> to vector<32x4xf32>
    %184 = arith.divf %180, %183 : vector<32x4xf32>
    %cst_46 = arith.constant 0.000000e+00 : f32
    %185 = vector.broadcast %cst_46 : f32 to vector<32x100xf32>
    %186 = tpu.concatenate %172, %184, %185 in 1 : vector<32x24xf32>, vector<32x4xf32>, vector<32x100xf32> -> vector<32x128xf32>
    %c0_47 = arith.constant 0 : index
    %c0_48 = arith.constant 0 : index
    %187 = vector.load %arg3[%c0_47, %c0_48] : memref<32x128xf32, #tpu.memory_space<vmem>>, vector<32x128xf32>
    tpu.vector_store %arg3[%c0_47, %c0_48], %186 {strides = array<i32>} : memref<32x128xf32, #tpu.memory_space<vmem>>, vector<32x128xf32>,
    return
  }
  func.func @transform_0(%arg0: i32) -> (i32, i32) {
    %c0_i32 = arith.constant 0 : i32
    %c0_i32_0 = arith.constant 0 : i32
    return %arg0, %c0_i32 : i32, i32
  }
  func.func @transform_1(%arg0: i32) -> (i32, i32) {
    %c0_i32 = arith.constant 0 : i32
    %c0_i32_0 = arith.constant 0 : i32
    %c0_i32_1 = arith.constant 0 : i32
    return %c0_i32, %c0_i32_0 : i32, i32
  }
  func.func @transform_2(%arg0: i32) -> (i32, i32) {
    %c0_i32 = arith.constant 0 : i32
    %c0_i32_0 = arith.constant 0 : i32
    return %arg0, %c0_i32 : i32, i32
  }
}

</mosaic_0001>

<llo_original>
// kernel: tpu_custom_call.1
$region0: #{tpu_custom_call.1}
  #allocation0 [shape = 'u32[]', space=smem, size = 0x4, offset = 0x4, fixed_abs, tag = 'smem constant byte address 0x4 - core index']
  #allocation1 [shape = 'u32[144,128]{1,0:T(1,128)}', space=vmem, size = 0x12000, scoped, tag = 'internal scratch']
  %s0 = inlined_call_operand.hbm [shape: f32[64,64], index: 0, kind: input, shape index: {}]
  %s1 = inlined_call_operand.hbm [shape: f32[640,256], index: 1, kind: input, shape index: {}]
  %s2 = inlined_call_operand.hbm [shape: f32[64,128], index: 2, kind: output, shape index: {}]
  %s3 = sld [smem:[#allocation0]]
  $region49: #{tpu_custom_call.1} parent=0
    _
  %s5 = ssub.s32 1, %s3
  %s6 = scalar_select 0, %s5, %s3
  $region1: #{tpu_custom_call.1} parent=0
    #allocation2 [shape = 'u8[32768]{0}', space=vmem, size = 0x8000, scoped, tag = 'input window, operand 0']
    #allocation3 [shape = 's32[2]{0}', space=sflag, size = 0x8, scoped, tag = 'scoped memory for tpu_custom_call.1']
    #allocation4 [shape = 's32[2]{0}', space=sflag, size = 0x8, scoped, tag = 'scoped memory for tpu_custom_call.1']
    #allocation5 [shape = 'u8[655360]{0}', space=vmem, size = 0xa0000, scoped, tag = 'input window, operand 1, single buffered']
    #allocation6 [shape = 's32[1]{0}', space=sflag, size = 0x4, scoped, tag = 'scoped memory for tpu_custom_call.1']
    #allocation7 [shape = 'u8[32768]{0}', space=vmem, size = 0x8000, scoped, tag = 'output window, operand 0']
    %7 = vsyncpa [#allocation3], 0
    %s8 = scalar_lea.sflag [#allocation3], 1
    %9 = vsyncpa %s8, 0
    %10 = vsyncpa [#allocation6], 0
    %11 = vsyncpa [#allocation4], 0
    %s12 = scalar_lea.sflag [#allocation4], 1
    %13 = vsyncpa %s12, 0
    loop: start=0, step=1, limit=4
    $region2: #{tpu_custom_call.1} parent=1 // loop_pre_header
      _
    $region3: #{tpu_custom_call.1} parent=1 // loop_header
      %s15 = sphi 0, %s19
      %p16 = scmp.ge.s32.totalorder %s15, 4
      %s25 = sphi 0, %s27
      %s28 = sphi 0, %s25
      %s29 = sphi 0, %s28
      %s45 = sphi 0, %s29
      %s49 = sphi 0, %s49
      %s51 = sphi 0, %s49
      %s52 = sphi 0, %s51
      %s66 = sphi 0, %s52
      %s72 = sphi 0, %s74
      %s75 = sphi 0, %s72
      %s76 = sphi 0, %s75
      %s92 = sphi 0, %s76
    $region4: #{tpu_custom_call.1} parent=1 // loop_header_branch
      %18 = sbr.rel (%p16) target = $region8
    $region5: #{tpu_custom_call.1} parent=1 // loop_body
      %s20 = ssub.s32 %s15, 1
      %s21 = ssub.s32 %s15, 2
      %s22 = sadd.s32 %s15, 1
      %s23 = ssub.s32 %s15, %s22
      %p24 = scmp.eq.s32.totalorder %s23, 0
      %s26 = sadd.s32 %s25, 1
      %s27 = scalar_select %p24, %s25, %s26
      %p30 = pneg %p24
      %p31 = scmp.eq.s32.totalorder %s15, 1
      %p32 = por %p30, %p31
      %p33 = scmp.ne.s32.totalorder %s25, %s28
      %p34 = scmp.eq.s32.totalorder %s15, 0
      %p35 = por %p33, %p34
      %p36 = scmp.ne.s32.totalorder %s25, %s28
      %p37 = scmp.eq.s32.totalorder %s20, 1
      %p38 = por %p36, %p37
      %p39 = scmp.ne.s32.totalorder %s28, %s29
      %p40 = scmp.eq.s32.totalorder %s20, 0
      %p41 = por %p39, %p40
      %p42 = scmp.ne.s32.totalorder %s28, %s29
      %p43 = scmp.eq.s32.totalorder %s21, 1
      %p44 = por %p42, %p43
      %p46 = scmp.ne.s32.totalorder %s29, %s45
      %p47 = scmp.eq.s32.totalorder %s21, 0
      %p48 = por %p46, %p47
      %s50 = sadd.s32 %s49, 1
      %p53 = scmp.eq.s32.totalorder %s15, 1
      %p54 = scmp.ne.s32.totalorder %s49, %s51
      %p55 = scmp.eq.s32.totalorder %s15, 0
      %p56 = por %p54, %p55
      %p57 = scmp.ne.s32.totalorder %s49, %s51
      %p58 = scmp.eq.s32.totalorder %s20, 1
      %p59 = por %p57, %p58
      %p60 = scmp.ne.s32.totalorder %s51, %s52
      %p61 = scmp.eq.s32.totalorder %s20, 0
      %p62 = por %p60, %p61
      %p63 = scmp.ne.s32.totalorder %s51, %s52
      %p64 = scmp.eq.s32.totalorder %s21, 1
      %p65 = por %p63, %p64
      %p67 = scmp.ne.s32.totalorder %s52, %s66
      %p68 = scmp.eq.s32.totalorder %s21, 0
      %p69 = por %p67, %p68
      %s70 = ssub.s32 %s15, %s22
      %p71 = scmp.eq.s32.totalorder %s70, 0
      %s73 = sadd.s32 %s72, 1
      %s74 = scalar_select %p71, %s72, %s73
      %p77 = pneg %p71
      %p78 = scmp.eq.s32.totalorder %s15, 1
      %p79 = por %p77, %p78
      %p80 = scmp.ne.s32.totalorder %s72, %s75
      %p81 = scmp.eq.s32.totalorder %s15, 0
      %p82 = por %p80, %p81
      %p83 = scmp.ne.s32.totalorder %s72, %s75
      %p84 = scmp.eq.s32.totalorder %s20, 1
      %p85 = por %p83, %p84
      %p86 = scmp.ne.s32.totalorder %s75, %s76
      %p87 = scmp.eq.s32.totalorder %s20, 0
      %p88 = por %p86, %p87
      %p89 = scmp.ne.s32.totalorder %s75, %s76
      %p90 = scmp.eq.s32.totalorder %s21, 1
      %p91 = por %p89, %p90
      %p93 = scmp.ne.s32.totalorder %s76, %s92
      %p94 = scmp.eq.s32.totalorder %s21, 0
      %p95 = por %p93, %p94
      %p96 = scmp.le.s32.totalorder 1, %s15
      %p97 = scmp.lt.s32.totalorder %s15, 3
      %p98 = pnand %p96, %p97
      %p99 = pneg %p98
      // Predicated region
      $region9: #{tpu_custom_call.1} parent=5 // pred_check
        _
      $region10: #{tpu_custom_call.1} parent=5 // pred_check_branch
        %101 = sbr.rel (%p98) target = $region12
      $region11: #{tpu_custom_call.1} parent=5 // pred_region
        %s102 = ssub.s32 %s15, 1
        // Predicated region
        $region13: #{tpu_custom_call.1} parent=11 // pred_check
          %p103 = pneg %p62
        $region14: #{tpu_custom_call.1} parent=11 // pred_check_branch
          %105 = sbr.rel (%p103) target = $region16
        $region15: #{tpu_custom_call.1} parent=11 // pred_region
          %s107 = ssub.s32 20480, 20480
          %108 = vsyncadd [#allocation6], %s107
          %s109 = sshll.u32 [#allocation5], 4
          %s110 = int_to_ptr.vmem [resolvable:$true] %s109
          %115 = dma.hbm_to_vmem [thread:$0]  %s1, 20480, %s110, [#allocation6], 256, 256, 16
        $region16: #{tpu_custom_call.1} parent=11 // pred_fallthru
          _
      $region12: #{tpu_custom_call.1} parent=5 // pred_fallthru
        _
      %p116 = scmp.lt.s32.totalorder %s15, 2
      // Predicated region
      $region17: #{tpu_custom_call.1} parent=5 // pred_check
        %p117 = pneg %p116
      $region18: #{tpu_custom_call.1} parent=5 // pred_check_branch
        %119 = sbr.rel (%p117) target = $region20
      $region19: #{tpu_custom_call.1} parent=5 // pred_region
        // Predicated region
        $region21: #{tpu_custom_call.1} parent=19 // pred_check
          %p120 = pneg %p35
        $region22: #{tpu_custom_call.1} parent=19 // pred_check_branch
          %122 = sbr.rel (%p120) target = $region24
        $region23: #{tpu_custom_call.1} parent=19 // pred_region
          %s123 = sand.u32 %s25, 1
          %s124 = scalar_lea.sflag [#allocation3], %s123
          %s125 = sand.u32 %s25, 1
          %s126 = smul.addr %s125, 32
          %s127 = scalar_lea.vmem [#allocation2], %s126
          %s128 = smul.u32 4, %s15
          %s130 = ssub.s32 512, 512
          %131 = vsyncadd %s124, %s130
          %s132 = smul.addr %s128, 128
          %s133 = scalar_lea.hbm %s0, %s132
          %s134 = sshll.u32 %s127, 4
          %s135 = int_to_ptr.vmem [resolvable:$true] %s134
          %140 = dma.hbm_to_vmem [thread:$0]  %s133, 512, %s135, %s124, 128, 128, 8
        $region24: #{tpu_custom_call.1} parent=19 // pred_fallthru
          _
      $region20: #{tpu_custom_call.1} parent=5 // pred_fallthru
        _
      %p141 = scmp.le.s32.totalorder 1, %s15
      %p142 = scmp.lt.s32.totalorder %s15, 3
      %p143 = pnand %p141, %p142
      %p144 = pneg %p143
      // Predicated region
      $region25: #{tpu_custom_call.1} parent=5 // pred_check
        _
      $region26: #{tpu_custom_call.1} parent=5 // pred_check_branch
        %146 = sbr.rel (%p143) target = $region28
      $region27: #{tpu_custom_call.1} parent=5 // pred_region
        %s147 = ssub.s32 %s15, 1
        %s148 = sand.u32 %s28, 1
        %s149 = scalar_lea.sflag [#allocation3], %s148
        %s150 = sand.u32 %s28, 1
        %s151 = smul.addr %s150, 32
        %s152 = scalar_lea.vmem [#allocation2], %s151
        // Predicated region
        $region29: #{tpu_custom_call.1} parent=27 // pred_check
          %p153 = pneg %p41
        $region30: #{tpu_custom_call.1} parent=27 // pred_check_branch
          %155 = sbr.rel (%p153) target = $region32
        $region31: #{tpu_custom_call.1} parent=27 // pred_region
          %156 = dma.done %s149, 512
        $region32: #{tpu_custom_call.1} parent=27 // pred_fallthru
          _
        // Predicated region
        $region33: #{tpu_custom_call.1} parent=27 // pred_check
          %p157 = pneg %p62
        $region34: #{tpu_custom_call.1} parent=27 // pred_check_branch
          %159 = sbr.rel (%p157) target = $region36
        $region35: #{tpu_custom_call.1} parent=27 // pred_region
          %160 = dma.done [#allocation6], 20480
        $region36: #{tpu_custom_call.1} parent=27 // pred_fallthru
          _
        %s161 = sand.u32 %s28, 1
        %s162 = scalar_lea.sflag [#allocation3], %s161
        %s163 = sand.u32 %s28, 1
        %s164 = smul.addr %s163, 32
        %s165 = scalar_lea.vmem [#allocation2], %s164
        %p166 = pneg %p41
        %p167 = pneg %p38
        %p168 = pneg %p62
        %p169 = pneg %p59
        %p170 = pneg %p88
        %p171 = pneg %p85
        %s172 = sand.u32 %s75, 1
        %s173 = scalar_lea.sflag [#allocation4], %s172
        %s174 = sand.u32 %s75, 1
        %s175 = smul.addr %s174, 32
        %s176 = scalar_lea.vmem [#allocation7], %s175
        %s177 = smul.u32 4, %s20
        %s178 = smul.u32 4, %s20
        %v179 = vld [vmem:[%s152] sm:$0xff]
        %v180 = vld [vmem:[%s152 + $0x8] sm:$0xff]
        %v181 = vld [vmem:[%s152 + $0x10] sm:$0xff]
        %v182 = vld [vmem:[%s152 + $0x18] sm:$0xff]
        %v183 = vld [vmem:[#allocation5] sm:$0xff]
        %v184 = vld [vmem:[#allocation5 + $0x10] sm:$0xff]
        %v185 = vld [vmem:[#allocation5 + $0x20] sm:$0xff]
        %190 = vrot.lane.b32.xlu0 %v179, 96
        %v191 = vpop.permute.xlu0 %190
        %192 = vrot.lane.b32.xlu0 %v180, 96
        %v193 = vpop.permute.xlu0 %192
        %194 = vrot.lane.b32.xlu0 %v181, 96
        %v195 = vpop.permute.xlu0 %194
        %196 = vrot.lane.b32.xlu0 %v182, 96
        %v197 = vpop.permute.xlu0 %196
        %vm198 = vcmask 195584
        %v199 = vsel %vm198, %v191, 0
        %v201 = vsel %vm198, %v193, 0
        %v203 = vsel %vm198, %v195, 0
        %v205 = vsel %vm198, %v197, 0
        %207 = vmatprep.subr.mxu0 0.0
        %208 = vmatpush1.msra.mxu0 0.0
        %209 = vmatprep.subr.mxu0 0.0
        %210 = vmatpush1.msra.mxu0 0.0
        %211 = vmatprep.subr.mxu0 0.0
        %212 = vmatpush1.msra.mxu0 0.0
        %213 = vmatprep.subr.mxu0 0.0
        %214 = vmatpush1.msra.mxu0 0.0
        %215 = vmatprep.subr.mxu0 0.0
        %216 = vmatpush1.msra.mxu0 0.0
        %217 = vmatprep.subr.mxu0 0.0
        %218 = vmatpush1.msra.mxu0 0.0
        %219 = vmatprep.subr.mxu0 0.0
        %220 = vmatpush1.msra.mxu0 0.0
        %221 = vmatprep.subr.mxu0 0.0
        %222 = vmatpush1.msra.mxu0 0.0
        %223 = vmatprep.subr.mxu0 0.0
        %224 = vmatpush1.msra.mxu0 0.0
        %225 = vmatprep.subr.mxu0 0.0
        %226 = vmatpush1.msra.mxu0 0.0
        %227 = vmatprep.subr.mxu0 0.0
        %228 = vmatpush1.msra.mxu0 0.0
        %229 = vmatprep.subr.mxu0 0.0
        %230 = vmatpush1.msra.mxu0 0.0
        %231 = vmatprep.subr.mxu0 0.0
        %232 = vmatpush1.msra.mxu0 0.0
        %233 = vmatprep.subr.mxu0 0.0
        %234 = vmatpush1.msra.mxu0 %v185
        %235 = vmatprep.subr.mxu0 0.0
        %236 = vmatpush1.msra.mxu0 %v184
        %237 = vmatprep.subr.mxu0 0.0
        %238 = vmatpush1.msra.mxu0 %v183
        %239 = vmatprep.subr.mxu0 0.0
        %240 = vmatpush2.msra.mxu0 0.0
        %241 = vmatprep.subr.mxu0 0.0
        %242 = vmatpush2.msra.mxu0 0.0
        %243 = vmatprep.subr.mxu0 0.0
        %244 = vmatpush2.msra.mxu0 0.0
        %245 = vmatprep.subr.mxu0 0.0
        %246 = vmatpush2.msra.mxu0 0.0
        %247 = vmatprep.subr.mxu0 0.0
        %248 = vmatpush2.msra.mxu0 0.0
        %249 = vmatprep.subr.mxu0 0.0
        %250 = vmatpush2.msra.mxu0 0.0
        %251 = vmatprep.subr.mxu0 0.0
        %252 = vmatpush2.msra.mxu0 0.0
        %253 = vmatprep.subr.mxu0 0.0
        %254 = vmatpush2.msra.mxu0 0.0
        %255 = vmatprep.subr.mxu0 0.0
        %256 = vmatpush2.msra.mxu0 0.0
        %257 = vmatprep.subr.mxu0 0.0
        %258 = vmatpush2.msra.mxu0 0.0
        %259 = vmatprep.subr.mxu0 0.0
        %260 = vmatpush2.msra.mxu0 0.0
        %261 = vmatprep.subr.mxu0 0.0
        %262 = vmatpush2.msra.mxu0 0.0
        %263 = vmatprep.subr.mxu0 0.0
        %264 = vmatpush2.msra.mxu0 0.0
        %265 = vmatprep.subr.mxu0 0.0
        %266 = vmatpush2.msra.mxu0 0.0
        %267 = vmatprep.subr.mxu0 0.0
        %268 = vmatpush2.msra.mxu0 0.0
        %269 = vmatprep.subr.mxu0 0.0
        %270 = vmatpush2.msra.mxu0 0.0
        %271 = vmatprep.mubr.f32.mxu0 0.0
        %272 = vmatmul.mubr.f32.gmra.mxu0 %v199
        %v273 = vpop.f32.mrf.mxu0
        %v274 = vadd.f32 0.0, %v273
        %v275 = vpop.f32.mrf.mxu0
        %276 = vmatprep.mubr.f32.mxu0 0.0
        %277 = vmatmul.mubr.f32.gmra.mxu0 %v201
        %v278 = vpop.f32.mrf.mxu0
        %v279 = vadd.f32 0.0, %v278
        %v280 = vpop.f32.mrf.mxu0
        %281 = vmatprep.mubr.f32.mxu0 0.0
        %282 = vmatmul.mubr.f32.gmra.mxu0 %v203
        %v283 = vpop.f32.mrf.mxu0
        %v284 = vadd.f32 0.0, %v283
        %v285 = vpop.f32.mrf.mxu0
        %286 = vmatprep.mubr.f32.mxu0 0.0
        %287 = vmatmul.mubr.f32.gmra.mxu0 %v205
        %v288 = vpop.f32.mrf.mxu0
        %v289 = vadd.f32 0.0, %v288
        %v290 = vpop.f32.mrf.mxu0
        %291 = vdwg.mxu0
        %v292 = vmul.f32 %v274, %v274
        %v293 = vmul.f32 %v279, %v279
        %v294 = vmul.f32 %v284, %v284
        %v295 = vmul.f32 %v289, %v289
        %300 = vrot.lane.b32.xlu0 %v292, 112
        %v301 = vpop.permute.xlu0 %300
        %302 = vrot.lane.b32.xlu0 %v293, 112
        %v303 = vpop.permute.xlu0 %302
        %304 = vrot.lane.b32.xlu0 %v294, 112
        %v305 = vpop.permute.xlu0 %304
        %306 = vrot.lane.b32.xlu0 %v295, 112
        %v307 = vpop.permute.xlu0 %306
        %v312 = vadd.f32 %v292, %v301
        %v313 = vadd.f32 %v293, %v303
        %v314 = vadd.f32 %v294, %v305
        %v315 = vadd.f32 %v295, %v307
        %316 = vrot.lane.b32.xlu0 %v292, 96
        %v317 = vpop.permute.xlu0 %316
        %318 = vrot.lane.b32.xlu0 %v293, 96
        %v319 = vpop.permute.xlu0 %318
        %320 = vrot.lane.b32.xlu0 %v294, 96
        %v321 = vpop.permute.xlu0 %320
        %322 = vrot.lane.b32.xlu0 %v295, 96
        %v323 = vpop.permute.xlu0 %322
        %v328 = vadd.f32 %v312, %v317
        %v329 = vadd.f32 %v313, %v319
        %v330 = vadd.f32 %v314, %v321
        %v331 = vadd.f32 %v315, %v323
        %v332 = vrsqrt.pop %v328
        %v333 = vmul.f32 %v328, %v332
        %vm334 = vcmp.eq.f32.partialorder %v328, inf
        %v335 = vsel %vm334, %v328, %v333
        %vm336 = vcmp.eq.f32.partialorder %v328, 0.0
        %v337 = vand.u32 %v328, 2147483648
        %v338 = vsel %vm336, %v337, %v335
        %v339 = vrsqrt.pop %v329
        %v340 = vmul.f32 %v329, %v339
        %vm341 = vcmp.eq.f32.partialorder %v329, inf
        %v342 = vsel %vm341, %v329, %v340
        %vm343 = vcmp.eq.f32.partialorder %v329, 0.0
        %v344 = vand.u32 %v329, 2147483648
        %v345 = vsel %vm343, %v344, %v342
        %v346 = vrsqrt.pop %v330
        %v347 = vmul.f32 %v330, %v346
        %vm348 = vcmp.eq.f32.partialorder %v330, inf
        %v349 = vsel %vm348, %v330, %v347
        %vm350 = vcmp.eq.f32.partialorder %v330, 0.0
        %v351 = vand.u32 %v330, 2147483648
        %v352 = vsel %vm350, %v351, %v349
        %v353 = vrsqrt.pop %v331
        %v354 = vmul.f32 %v331, %v353
        %vm355 = vcmp.eq.f32.partialorder %v331, inf
        %v356 = vsel %vm355, %v331, %v354
        %vm357 = vcmp.eq.f32.partialorder %v331, 0.0
        %v358 = vand.u32 %v331, 2147483648
        %v359 = vsel %vm357, %v358, %v356
        %v360 = vld [vmem:[#allocation5 + $0x40] sm:$0xff]
        %v361 = vld [vmem:[#allocation5 + $0x50] sm:$0xff]
        %v362 = vld [vmem:[#allocation5 + $0x60] sm:$0xff]
        %v363 = vld [vmem:[#allocation5 + $0x70] sm:$0xff]
        %v364 = vld [vmem:[#allocation5 + $0x80] sm:$0xff]
        %v365 = vld [vmem:[#allocation5 + $0x90] sm:$0xff]
        %vm366 = vcmask 261120
        %v367 = vsel %vm366, %v179, 0
        %v369 = vsel %vm366, %v180, 0
        %v371 = vsel %vm366, %v181, 0
        %v373 = vsel %vm366, %v182, 0
        %375 = vmatprep.subr.mxu0 0.0
        %376 = vmatpush1.msra.mxu0 0.0
        %377 = vmatprep.subr.mxu0 0.0
        %378 = vmatpush1.msra.mxu0 0.0
        %379 = vmatprep.subr.mxu0 0.0
        %380 = vmatpush1.msra.mxu0 0.0
        %381 = vmatprep.subr.mxu0 0.0
        %382 = vmatpush1.msra.mxu0 0.0
        %383 = vmatprep.subr.mxu0 0.0
        %384 = vmatpush1.msra.mxu0 0.0
        %385 = vmatprep.subr.mxu0 0.0
        %386 = vmatpush1.msra.mxu0 0.0
        %387 = vmatprep.subr.mxu0 0.0
        %388 = vmatpush1.msra.mxu0 0.0
        %389 = vmatprep.subr.mxu0 0.0
        %390 = vmatpush1.msra.mxu0 0.0
        %391 = vmatprep.subr.mxu0 0.0
        %392 = vmatpush1.msra.mxu0 0.0
        %393 = vmatprep.subr.mxu0 0.0
        %394 = vmatpush1.msra.mxu0 0.0
        %395 = vmatprep.subr.mxu0 0.0
        %396 = vmatpush1.msra.mxu0 0.0
        %397 = vmatprep.subr.mxu0 0.0
        %398 = vmatpush1.msra.mxu0 0.0
        %399 = vmatprep.subr.mxu0 0.0
        %400 = vmatpush1.msra.mxu0 %v365
        %401 = vmatprep.subr.mxu0 0.0
        %402 = vmatpush1.msra.mxu0 %v364
        %403 = vmatprep.subr.mxu0 0.0
        %404 = vmatpush1.msra.mxu0 %v363
        %405 = vmatprep.subr.mxu0 0.0
        %406 = vmatpush1.msra.mxu0 %v362
        %407 = vmatprep.subr.mxu0 0.0
        %408 = vmatpush2.msra.mxu0 0.0
        %409 = vmatprep.subr.mxu0 0.0
        %410 = vmatpush2.msra.mxu0 0.0
        %411 = vmatprep.subr.mxu0 0.0
        %412 = vmatpush2.msra.mxu0 0.0
        %413 = vmatprep.subr.mxu0 0.0
        %414 = vmatpush2.msra.mxu0 0.0
        %415 = vmatprep.subr.mxu0 0.0
        %416 = vmatpush2.msra.mxu0 0.0
        %417 = vmatprep.subr.mxu0 0.0
        %418 = vmatpush2.msra.mxu0 0.0
        %419 = vmatprep.subr.mxu0 0.0
        %420 = vmatpush2.msra.mxu0 0.0
        %421 = vmatprep.subr.mxu0 0.0
        %422 = vmatpush2.msra.mxu0 0.0
        %423 = vmatprep.subr.mxu0 0.0
        %424 = vmatpush2.msra.mxu0 0.0
        %425 = vmatprep.subr.mxu0 0.0
        %426 = vmatpush2.msra.mxu0 0.0
        %427 = vmatprep.subr.mxu0 0.0
        %428 = vmatpush2.msra.mxu0 0.0
        %429 = vmatprep.subr.mxu0 0.0
        %430 = vmatpush2.msra.mxu0 0.0
        %431 = vmatprep.subr.mxu0 0.0
        %432 = vmatpush2.msra.mxu0 0.0
        %433 = vmatprep.subr.mxu0 0.0
        %434 = vmatpush2.msra.mxu0 0.0
        %435 = vmatprep.subr.mxu0 0.0
        %436 = vmatpush2.msra.mxu0 0.0
        %437 = vmatprep.subr.mxu0 0.0
        %438 = vmatpush2.msra.mxu0 0.0
        %439 = vmatprep.mubr.f32.mxu0 0.0
        %440 = vmatmul.mubr.f32.gmra.mxu0 %v367
        %v441 = vpop.f32.mrf.mxu0
        %v442 = vadd.f32 0.0, %v441
        %v443 = vpop.f32.mrf.mxu0
        %444 = vmatprep.mubr.f32.mxu0 0.0
        %445 = vmatmul.mubr.f32.gmra.mxu0 %v369
        %v446 = vpop.f32.mrf.mxu0
        %v447 = vadd.f32 0.0, %v446
        %v448 = vpop.f32.mrf.mxu0
        %449 = vmatprep.mubr.f32.mxu0 0.0
        %450 = vmatmul.mubr.f32.gmra.mxu0 %v371
        %v451 = vpop.f32.mrf.mxu0
        %v452 = vadd.f32 0.0, %v451
        %v453 = vpop.f32.mrf.mxu0
        %454 = vmatprep.mubr.f32.mxu0 0.0
        %455 = vmatmul.mubr.f32.gmra.mxu0 %v373
        %v456 = vpop.f32.mrf.mxu0
        %v457 = vadd.f32 0.0, %v456
        %v458 = vpop.f32.mrf.mxu0
        %459 = vdwg.mxu0
        %vm460 = vcmask 130048
        %v462 = vsel %vm460, %v338, 0
        %v465 = vsel %vm460, %v345, 0
        %v468 = vsel %vm460, %v352, 0
        %v471 = vsel %vm460, %v359, 0
        %473 = vmatprep.subr.mxu0 0.0
        %474 = vmatpush1.msra.mxu0 0.0
        %475 = vmatprep.subr.mxu0 0.0
        %476 = vmatpush1.msra.mxu0 0.0
        %477 = vmatprep.subr.mxu0 0.0
        %478 = vmatpush1.msra.mxu0 0.0
        %479 = vmatprep.subr.mxu0 0.0
        %480 = vmatpush1.msra.mxu0 0.0
        %481 = vmatprep.subr.mxu0 0.0
        %482 = vmatpush1.msra.mxu0 0.0
        %483 = vmatprep.subr.mxu0 0.0
        %484 = vmatpush1.msra.mxu0 0.0
        %485 = vmatprep.subr.mxu0 0.0
        %486 = vmatpush1.msra.mxu0 0.0
        %487 = vmatprep.subr.mxu0 0.0
        %488 = vmatpush1.msra.mxu0 0.0
        %489 = vmatprep.subr.mxu0 0.0
        %490 = vmatpush1.msra.mxu0 0.0
        %491 = vmatprep.subr.mxu0 0.0
        %492 = vmatpush1.msra.mxu0 0.0
        %493 = vmatprep.subr.mxu0 0.0
        %494 = vmatpush1.msra.mxu0 0.0
        %495 = vmatprep.subr.mxu0 0.0
        %496 = vmatpush1.msra.mxu0 0.0
        %497 = vmatprep.subr.mxu0 0.0
        %498 = vmatpush1.msra.mxu0 0.0
        %499 = vmatprep.subr.mxu0 0.0
        %500 = vmatpush1.msra.mxu0 0.0
        %501 = vmatprep.subr.mxu0 0.0
        %502 = vmatpush1.msra.mxu0 %v361
        %503 = vmatprep.subr.mxu0 0.0
        %504 = vmatpush1.msra.mxu0 %v360
        %505 = vmatprep.subr.mxu0 0.0
        %506 = vmatpush2.msra.mxu0 0.0
        %507 = vmatprep.subr.mxu0 0.0
        %508 = vmatpush2.msra.mxu0 0.0
        %509 = vmatprep.subr.mxu0 0.0
        %510 = vmatpush2.msra.mxu0 0.0
        %511 = vmatprep.subr.mxu0 0.0
        %512 = vmatpush2.msra.mxu0 0.0
        %513 = vmatprep.subr.mxu0 0.0
        %514 = vmatpush2.msra.mxu0 0.0
        %515 = vmatprep.subr.mxu0 0.0
        %516 = vmatpush2.msra.mxu0 0.0
        %517 = vmatprep.subr.mxu0 0.0
        %518 = vmatpush2.msra.mxu0 0.0
        %519 = vmatprep.subr.mxu0 0.0
        %520 = vmatpush2.msra.mxu0 0.0
        %521 = vmatprep.subr.mxu0 0.0
        %522 = vmatpush2.msra.mxu0 0.0
        %523 = vmatprep.subr.mxu0 0.0
        %524 = vmatpush2.msra.mxu0 0.0
        %525 = vmatprep.subr.mxu0 0.0
        %526 = vmatpush2.msra.mxu0 0.0
        %527 = vmatprep.subr.mxu0 0.0
        %528 = vmatpush2.msra.mxu0 0.0
        %529 = vmatprep.subr.mxu0 0.0
        %530 = vmatpush2.msra.mxu0 0.0
        %531 = vmatprep.subr.mxu0 0.0
        %532 = vmatpush2.msra.mxu0 0.0
        %533 = vmatprep.subr.mxu0 0.0
        %534 = vmatpush2.msra.mxu0 0.0
        %535 = vmatprep.subr.mxu0 0.0
        %536 = vmatpush2.msra.mxu0 0.0
        %537 = vmatprep.mubr.f32.mxu0 0.0
        %538 = vmatmul.mubr.f32.gmra.mxu0 %v462
        %v539 = vpop.f32.mrf.mxu0
        %v540 = vadd.f32 %v442, %v539
        %v541 = vpop.f32.mrf.mxu0
        %542 = vmatprep.mubr.f32.mxu0 0.0
        %543 = vmatmul.mubr.f32.gmra.mxu0 %v465
        %v544 = vpop.f32.mrf.mxu0
        %v545 = vadd.f32 %v447, %v544
        %v546 = vpop.f32.mrf.mxu0
        %547 = vmatprep.mubr.f32.mxu0 0.0
        %548 = vmatmul.mubr.f32.gmra.mxu0 %v468
        %v549 = vpop.f32.mrf.mxu0
        %v550 = vadd.f32 %v452, %v549
        %v551 = vpop.f32.mrf.mxu0
        %552 = vmatprep.mubr.f32.mxu0 0.0
        %553 = vmatmul.mubr.f32.gmra.mxu0 %v471
        %v554 = vpop.f32.mrf.mxu0
        %v555 = vadd.f32 %v457, %v554
        %v556 = vpop.f32.mrf.mxu0
        %557 = vdwg.mxu0
        %v558 = vld [vmem:[#allocation5 + $0xa0] ss:$0 sm:$0xff]
        %560 = vrot.lane.b32.xlu0 %v558, 32
        %v561 = vpop.permute.xlu0 %560
        %v563 = vadd.f32 %v540, %v561
        %v564 = vadd.f32 %v545, %v561
        %v565 = vadd.f32 %v550, %v561
        %v566 = vadd.f32 %v555, %v561
        %v567 = vxor.u32 %v563, 2147483648
        %v568 = vxor.u32 %v564, 2147483648
        %v569 = vxor.u32 %v565, 2147483648
        %v570 = vxor.u32 %v566, 2147483648
        %v571 = vmul.f32 %v567, 1.442695
        %v572 = vpow.pop %v571
        %v573 = vmul.f32 %v568, 1.442695
        %v574 = vpow.pop %v573
        %v575 = vmul.f32 %v569, 1.442695
        %v576 = vpow.pop %v575
        %v577 = vmul.f32 %v570, 1.442695
        %v578 = vpow.pop %v577
        %v579 = vadd.f32 %v572, 1.0
        %v580 = vadd.f32 %v574, 1.0
        %v581 = vadd.f32 %v576, 1.0
        %v582 = vadd.f32 %v578, 1.0
        %v583 = vrcp.pop %v579
        %v584 = vmul.f32 1.0, %v583
        %v585 = vrcp.pop %v580
        %v586 = vmul.f32 1.0, %v585
        %v587 = vrcp.pop %v581
        %v588 = vmul.f32 1.0, %v587
        %v589 = vrcp.pop %v582
        %v590 = vmul.f32 1.0, %v589
        %v591 = vld [vmem:[#allocation5 + $0xc0] sm:$0xff]
        %v592 = vld [vmem:[#allocation5 + $0xd0] sm:$0xff]
        %v593 = vld [vmem:[#allocation5 + $0xe0] sm:$0xff]
        %v594 = vld [vmem:[#allocation5 + $0xf0] sm:$0xff]
        %v595 = vld [vmem:[#allocation5 + $0x100] sm:$0xff]
        %v596 = vld [vmem:[#allocation5 + $0x110] sm:$0xff]
        %vm597 = vcmask 392192
        %v599 = vsel %vm597, %v274, 0
        %v602 = vsel %vm597, %v279, 0
        %v605 = vsel %vm597, %v284, 0
        %v608 = vsel %vm597, %v289, 0
        %610 = vmatprep.subr.mxu0 0.0
        %611 = vmatpush1.msra.mxu0 0.0
        %612 = vmatprep.subr.mxu0 0.0
        %613 = vmatpush1.msra.mxu0 0.0
        %614 = vmatprep.subr.mxu0 0.0
        %615 = vmatpush1.msra.mxu0 0.0
        %616 = vmatprep.subr.mxu0 0.0
        %617 = vmatpush1.msra.mxu0 0.0
        %618 = vmatprep.subr.mxu0 0.0
        %619 = vmatpush1.msra.mxu0 0.0
        %620 = vmatprep.subr.mxu0 0.0
        %621 = vmatpush1.msra.mxu0 0.0
        %622 = vmatprep.subr.mxu0 0.0
        %623 = vmatpush1.msra.mxu0 0.0
        %624 = vmatprep.subr.mxu0 0.0
        %625 = vmatpush1.msra.mxu0 0.0
        %626 = vmatprep.subr.mxu0 0.0
        %627 = vmatpush1.msra.mxu0 0.0
        %628 = vmatprep.subr.mxu0 0.0
        %629 = vmatpush1.msra.mxu0 0.0
        %630 = vmatprep.subr.mxu0 0.0
        %631 = vmatpush1.msra.mxu0 %v596
        %632 = vmatprep.subr.mxu0 0.0
        %633 = vmatpush1.msra.mxu0 %v595
        %634 = vmatprep.subr.mxu0 0.0
        %635 = vmatpush1.msra.mxu0 %v594
        %636 = vmatprep.subr.mxu0 0.0
        %637 = vmatpush1.msra.mxu0 %v593
        %638 = vmatprep.subr.mxu0 0.0
        %639 = vmatpush1.msra.mxu0 %v592
        %640 = vmatprep.subr.mxu0 0.0
        %641 = vmatpush1.msra.mxu0 %v591
        %642 = vmatprep.subr.mxu0 0.0
        %643 = vmatpush2.msra.mxu0 0.0
        %644 = vmatprep.subr.mxu0 0.0
        %645 = vmatpush2.msra.mxu0 0.0
        %646 = vmatprep.subr.mxu0 0.0
        %647 = vmatpush2.msra.mxu0 0.0
        %648 = vmatprep.subr.mxu0 0.0
        %649 = vmatpush2.msra.mxu0 0.0
        %650 = vmatprep.subr.mxu0 0.0
        %651 = vmatpush2.msra.mxu0 0.0
        %652 = vmatprep.subr.mxu0 0.0
        %653 = vmatpush2.msra.mxu0 0.0
        %654 = vmatprep.subr.mxu0 0.0
        %655 = vmatpush2.msra.mxu0 0.0
        %656 = vmatprep.subr.mxu0 0.0
        %657 = vmatpush2.msra.mxu0 0.0
        %658 = vmatprep.subr.mxu0 0.0
        %659 = vmatpush2.msra.mxu0 0.0
        %660 = vmatprep.subr.mxu0 0.0
        %661 = vmatpush2.msra.mxu0 0.0
        %662 = vmatprep.subr.mxu0 0.0
        %663 = vmatpush2.msra.mxu0 0.0
        %664 = vmatprep.subr.mxu0 0.0
        %665 = vmatpush2.msra.mxu0 0.0
        %666 = vmatprep.subr.mxu0 0.0
        %667 = vmatpush2.msra.mxu0 0.0
        %668 = vmatprep.subr.mxu0 0.0
        %669 = vmatpush2.msra.mxu0 0.0
        %670 = vmatprep.subr.mxu0 0.0
        %671 = vmatpush2.msra.mxu0 0.0
        %672 = vmatprep.subr.mxu0 0.0
        %673 = vmatpush2.msra.mxu0 0.0
        %674 = vmatprep.mubr.f32.mxu0 0.0
        %675 = vmatmul.mubr.f32.gmra.mxu0 %v599
        %v676 = vpop.f32.mrf.mxu0
        %v677 = vadd.f32 0.0, %v676
        %v678 = vpop.f32.mrf.mxu0
        %679 = vmatprep.mubr.f32.mxu0 0.0
        %680 = vmatmul.mubr.f32.gmra.mxu0 %v602
        %v681 = vpop.f32.mrf.mxu0
        %v682 = vadd.f32 0.0, %v681
        %v683 = vpop.f32.mrf.mxu0
        %684 = vmatprep.mubr.f32.mxu0 0.0
        %685 = vmatmul.mubr.f32.gmra.mxu0 %v605
        %v686 = vpop.f32.mrf.mxu0
        %v687 = vadd.f32 0.0, %v686
        %v688 = vpop.f32.mrf.mxu0
        %689 = vmatprep.mubr.f32.mxu0 0.0
        %690 = vmatmul.mubr.f32.gmra.mxu0 %v608
        %v691 = vpop.f32.mrf.mxu0
        %v692 = vadd.f32 0.0, %v691
        %v693 = vpop.f32.mrf.mxu0
        %694 = vdwg.mxu0
        %699 = vrot.lane.b32.xlu0 %v584, 96
        %v700 = vpop.permute.xlu0 %699
        %701 = vrot.lane.b32.xlu0 %v586, 96
        %v702 = vpop.permute.xlu0 %701
        %703 = vrot.lane.b32.xlu0 %v588, 96
        %v704 = vpop.permute.xlu0 %703
        %705 = vrot.lane.b32.xlu0 %v590, 96
        %v706 = vpop.permute.xlu0 %705
        %711 = vrot.lane.b32.xlu0 %v584, 112
        %v712 = vpop.permute.xlu0 %711
        %713 = vrot.lane.b32.xlu0 %v586, 112
        %v714 = vpop.permute.xlu0 %713
        %715 = vrot.lane.b32.xlu0 %v588, 112
        %v716 = vpop.permute.xlu0 %715
        %717 = vrot.lane.b32.xlu0 %v590, 112
        %v718 = vpop.permute.xlu0 %717
        %v723 = vsel %vm460, %v700, %v712
        %v724 = vsel %vm460, %v702, %v714
        %v725 = vsel %vm460, %v704, %v716
        %v726 = vsel %vm460, %v706, %v718
        %v727 = vsel %vm366, %v723, %v584
        %v728 = vsel %vm366, %v724, %v586
        %v729 = vsel %vm366, %v725, %v588
        %v730 = vsel %vm366, %v726, %v590
        %v731 = vmul.f32 %v677, %v727
        %v732 = vmul.f32 %v682, %v728
        %v733 = vmul.f32 %v687, %v729
        %v734 = vmul.f32 %v692, %v730
        %v735 = vld [vmem:[#allocation5 + $0x120] sm:$0xff]
        %v736 = vld [vmem:[#allocation5 + $0x130] sm:$0xff]
        %v737 = vld [vmem:[#allocation5 + $0x140] sm:$0xff]
        %v738 = vld [vmem:[#allocation5 + $0x150] sm:$0xff]
        %v739 = vld [vmem:[#allocation5 + $0x160] sm:$0xff]
        %v740 = vld [vmem:[#allocation5 + $0x170] sm:$0xff]
        %v742 = vsel %vm597, %v731, 0
        %v745 = vsel %vm597, %v732, 0
        %v748 = vsel %vm597, %v733, 0
        %v751 = vsel %vm597, %v734, 0
        %753 = vmatprep.subr.mxu0 0.0
        %754 = vmatpush1.msra.mxu0 0.0
        %755 = vmatprep.subr.mxu0 0.0
        %756 = vmatpush1.msra.mxu0 0.0
        %757 = vmatprep.subr.mxu0 0.0
        %758 = vmatpush1.msra.mxu0 0.0
        %759 = vmatprep.subr.mxu0 0.0
        %760 = vmatpush1.msra.mxu0 0.0
        %761 = vmatprep.subr.mxu0 0.0
        %762 = vmatpush1.msra.mxu0 0.0
        %763 = vmatprep.subr.mxu0 0.0
        %764 = vmatpush1.msra.mxu0 0.0
        %765 = vmatprep.subr.mxu0 0.0
        %766 = vmatpush1.msra.mxu0 0.0
        %767 = vmatprep.subr.mxu0 0.0
        %768 = vmatpush1.msra.mxu0 0.0
        %769 = vmatprep.subr.mxu0 0.0
        %770 = vmatpush1.msra.mxu0 0.0
        %771 = vmatprep.subr.mxu0 0.0
        %772 = vmatpush1.msra.mxu0 0.0
        %773 = vmatprep.subr.mxu0 0.0
        %774 = vmatpush1.msra.mxu0 %v740
        %775 = vmatprep.subr.mxu0 0.0
        %776 = vmatpush1.msra.mxu0 %v739
        %777 = vmatprep.subr.mxu0 0.0
        %778 = vmatpush1.msra.mxu0 %v738
        %779 = vmatprep.subr.mxu0 0.0
        %780 = vmatpush1.msra.mxu0 %v737
        %781 = vmatprep.subr.mxu0 0.0
        %782 = vmatpush1.msra.mxu0 %v736
        %783 = vmatprep.subr.mxu0 0.0
        %784 = vmatpush1.msra.mxu0 %v735
        %785 = vmatprep.subr.mxu0 0.0
        %786 = vmatpush2.msra.mxu0 0.0
        %787 = vmatprep.subr.mxu0 0.0
        %788 = vmatpush2.msra.mxu0 0.0
        %789 = vmatprep.subr.mxu0 0.0
        %790 = vmatpush2.msra.mxu0 0.0
        %791 = vmatprep.subr.mxu0 0.0
        %792 = vmatpush2.msra.mxu0 0.0
        %793 = vmatprep.subr.mxu0 0.0
        %794 = vmatpush2.msra.mxu0 0.0
        %795 = vmatprep.subr.mxu0 0.0
        %796 = vmatpush2.msra.mxu0 0.0
        %797 = vmatprep.subr.mxu0 0.0
        %798 = vmatpush2.msra.mxu0 0.0
        %799 = vmatprep.subr.mxu0 0.0
        %800 = vmatpush2.msra.mxu0 0.0
        %801 = vmatprep.subr.mxu0 0.0
        %802 = vmatpush2.msra.mxu0 0.0
        %803 = vmatprep.subr.mxu0 0.0
        %804 = vmatpush2.msra.mxu0 0.0
        %805 = vmatprep.subr.mxu0 0.0
        %806 = vmatpush2.msra.mxu0 0.0
        %807 = vmatprep.subr.mxu0 0.0
        %808 = vmatpush2.msra.mxu0 0.0
        %809 = vmatprep.subr.mxu0 0.0
        %810 = vmatpush2.msra.mxu0 0.0
        %811 = vmatprep.subr.mxu0 0.0
        %812 = vmatpush2.msra.mxu0 0.0
        %813 = vmatprep.subr.mxu0 0.0
        %814 = vmatpush2.msra.mxu0 0.0
        %815 = vmatprep.subr.mxu0 0.0
        %816 = vmatpush2.msra.mxu0 0.0
        %817 = vmatprep.mubr.f32.mxu0 0.0
        %818 = vmatmul.mubr.f32.gmra.mxu0 %v742
        %v819 = vpop.f32.mrf.mxu0
        %v820 = vadd.f32 0.0, %v819
        %v821 = vpop.f32.mrf.mxu0
        %822 = vmatprep.mubr.f32.mxu0 0.0
        %823 = vmatmul.mubr.f32.gmra.mxu0 %v745
        %v824 = vpop.f32.mrf.mxu0
        %v825 = vadd.f32 0.0, %v824
        %v826 = vpop.f32.mrf.mxu0
        %827 = vmatprep.mubr.f32.mxu0 0.0
        %828 = vmatmul.mubr.f32.gmra.mxu0 %v748
        %v829 = vpop.f32.mrf.mxu0
        %v830 = vadd.f32 0.0, %v829
        %v831 = vpop.f32.mrf.mxu0
        %832 = vmatprep.mubr.f32.mxu0 0.0
        %833 = vmatmul.mubr.f32.gmra.mxu0 %v751
        %v834 = vpop.f32.mrf.mxu0
        %v835 = vadd.f32 0.0, %v834
        %v836 = vpop.f32.mrf.mxu0
        %837 = vdwg.mxu0
        %v838 = vmul.f32 %v731, %v820
        %v839 = vmul.f32 %v732, %v825
        %v840 = vmul.f32 %v733, %v830
        %v841 = vmul.f32 %v734, %v835
        %846 = vrot.lane.b32.xlu0 %v838, 112
        %v847 = vpop.permute.xlu0 %846
        %848 = vrot.lane.b32.xlu0 %v839, 112
        %v849 = vpop.permute.xlu0 %848
        %850 = vrot.lane.b32.xlu0 %v840, 112
        %v851 = vpop.permute.xlu0 %850
        %852 = vrot.lane.b32.xlu0 %v841, 112
        %v853 = vpop.permute.xlu0 %852
        %v858 = vadd.f32 %v838, %v847
        %v859 = vadd.f32 %v839, %v849
        %v860 = vadd.f32 %v840, %v851
        %v861 = vadd.f32 %v841, %v853
        %862 = vrot.lane.b32.xlu0 %v838, 96
        %v863 = vpop.permute.xlu0 %862
        %864 = vrot.lane.b32.xlu0 %v839, 96
        %v865 = vpop.permute.xlu0 %864
        %866 = vrot.lane.b32.xlu0 %v840, 96
        %v867 = vpop.permute.xlu0 %866
        %868 = vrot.lane.b32.xlu0 %v841, 96
        %v869 = vpop.permute.xlu0 %868
        %v874 = vadd.f32 %v858, %v863
        %v875 = vadd.f32 %v859, %v865
        %v876 = vadd.f32 %v860, %v867
        %v877 = vadd.f32 %v861, %v869
        %v878 = vmul.f32 %v820, %v820
        %v879 = vmul.f32 %v825, %v825
        %v880 = vmul.f32 %v830, %v830
        %v881 = vmul.f32 %v835, %v835
        %886 = vrot.lane.b32.xlu0 %v878, 112
        %v887 = vpop.permute.xlu0 %886
        %888 = vrot.lane.b32.xlu0 %v879, 112
        %v889 = vpop.permute.xlu0 %888
        %890 = vrot.lane.b32.xlu0 %v880, 112
        %v891 = vpop.permute.xlu0 %890
        %892 = vrot.lane.b32.xlu0 %v881, 112
        %v893 = vpop.permute.xlu0 %892
        %v898 = vadd.f32 %v878, %v887
        %v899 = vadd.f32 %v879, %v889
        %v900 = vadd.f32 %v880, %v891
        %v901 = vadd.f32 %v881, %v893
        %902 = vrot.lane.b32.xlu0 %v878, 96
        %v903 = vpop.permute.xlu0 %902
        %904 = vrot.lane.b32.xlu0 %v879, 96
        %v905 = vpop.permute.xlu0 %904
        %906 = vrot.lane.b32.xlu0 %v880, 96
        %v907 = vpop.permute.xlu0 %906
        %908 = vrot.lane.b32.xlu0 %v881, 96
        %v909 = vpop.permute.xlu0 %908
        %v914 = vadd.f32 %v898, %v903
        %v915 = vadd.f32 %v899, %v905
        %v916 = vadd.f32 %v900, %v907
        %v917 = vadd.f32 %v901, %v909
        %vm918 = vcmp.ge.f32.partialorder %v874, 0.0
        %vm919 = vcmp.ge.f32.partialorder %v875, 0.0
        %vm920 = vcmp.ge.f32.partialorder %v876, 0.0
        %vm921 = vcmp.ge.f32.partialorder %v877, 0.0
        %v922 = vsel %vm918, 1, 0
        %v923 = vsel %vm919, 1, 0
        %v924 = vsel %vm920, 1, 0
        %v925 = vsel %vm921, 1, 0
        %v926 = vcvt.s32.f32 %v922
        %v927 = vcvt.s32.f32 %v923
        %v928 = vcvt.s32.f32 %v924
        %v929 = vcvt.s32.f32 %v925
        %v930 = vadd.f32 %v914, 1e-06
        %v931 = vadd.f32 %v915, 1e-06
        %v932 = vadd.f32 %v916, 1e-06
        %v933 = vadd.f32 %v917, 1e-06
        %v934 = vrcp.pop %v930
        %v935 = vmul.f32 %v874, %v934
        %v936 = vrcp.pop %v931
        %v937 = vmul.f32 %v875, %v936
        %v938 = vrcp.pop %v932
        %v939 = vmul.f32 %v876, %v938
        %v940 = vrcp.pop %v933
        %v941 = vmul.f32 %v877, %v940
        %946 = vrot.lane.b32.xlu0 %v935, 16
        %v947 = vpop.permute.xlu0 %946
        %948 = vrot.lane.b32.xlu0 %v937, 16
        %v949 = vpop.permute.xlu0 %948
        %950 = vrot.lane.b32.xlu0 %v939, 16
        %v951 = vpop.permute.xlu0 %950
        %952 = vrot.lane.b32.xlu0 %v941, 16
        %v953 = vpop.permute.xlu0 %952
        %958 = vrot.lane.b32.xlu0 %v935, 32
        %v959 = vpop.permute.xlu0 %958
        %960 = vrot.lane.b32.xlu0 %v937, 32
        %v961 = vpop.permute.xlu0 %960
        %962 = vrot.lane.b32.xlu0 %v939, 32
        %v963 = vpop.permute.xlu0 %962
        %964 = vrot.lane.b32.xlu0 %v941, 32
        %v965 = vpop.permute.xlu0 %964
        %v970 = vsel %vm460, %v935, %v947
        %v971 = vsel %vm460, %v937, %v949
        %v972 = vsel %vm460, %v939, %v951
        %v973 = vsel %vm460, %v941, %v953
        %v974 = vsel %vm366, %v970, %v959
        %v975 = vsel %vm366, %v971, %v961
        %v976 = vsel %vm366, %v972, %v963
        %v977 = vsel %vm366, %v973, %v965
        %v978 = vmul.f32 %v974, %v820
        %v979 = vmul.f32 %v975, %v825
        %v980 = vmul.f32 %v976, %v830
        %v981 = vmul.f32 %v977, %v835
        %v982 = vsub.f32 %v731, %v978
        %v983 = vsub.f32 %v732, %v979
        %v984 = vsub.f32 %v733, %v980
        %v985 = vsub.f32 %v734, %v981
        %990 = vrot.lane.b32.xlu0 %v926, 16
        %v991 = vpop.permute.xlu0 %990
        %992 = vrot.lane.b32.xlu0 %v927, 16
        %v993 = vpop.permute.xlu0 %992
        %994 = vrot.lane.b32.xlu0 %v928, 16
        %v995 = vpop.permute.xlu0 %994
        %996 = vrot.lane.b32.xlu0 %v929, 16
        %v997 = vpop.permute.xlu0 %996
        %1002 = vrot.lane.b32.xlu0 %v926, 32
        %v1003 = vpop.permute.xlu0 %1002
        %1004 = vrot.lane.b32.xlu0 %v927, 32
        %v1005 = vpop.permute.xlu0 %1004
        %1006 = vrot.lane.b32.xlu0 %v928, 32
        %v1007 = vpop.permute.xlu0 %1006
        %1008 = vrot.lane.b32.xlu0 %v929, 32
        %v1009 = vpop.permute.xlu0 %1008
        %v1014 = vsel %vm460, %v926, %v991
        %v1015 = vsel %vm460, %v927, %v993
        %v1016 = vsel %vm460, %v928, %v995
        %v1017 = vsel %vm460, %v929, %v997
        %v1018 = vsel %vm366, %v1014, %v1003
        %v1019 = vsel %vm366, %v1015, %v1005
        %v1020 = vsel %vm366, %v1016, %v1007
        %v1021 = vsel %vm366, %v1017, %v1009
        %v1022 = vmul.f32 %v731, 0.2
        %v1023 = vmul.f32 %v732, 0.2
        %v1024 = vmul.f32 %v733, 0.2
        %v1025 = vmul.f32 %v734, 0.2
        %v1026 = vmul.f32 %v1018, %v731
        %v1027 = vmul.f32 %v1019, %v732
        %v1028 = vmul.f32 %v1020, %v733
        %v1029 = vmul.f32 %v1021, %v734
        %v1030 = vsub.f32 1.0, %v1018
        %v1031 = vsub.f32 1.0, %v1019
        %v1032 = vsub.f32 1.0, %v1020
        %v1033 = vsub.f32 1.0, %v1021
        %v1034 = vmul.f32 %v1030, %v982
        %v1035 = vmul.f32 %v1031, %v983
        %v1036 = vmul.f32 %v1032, %v984
        %v1037 = vmul.f32 %v1033, %v985
        %v1038 = vadd.f32 %v1026, %v1034
        %v1039 = vadd.f32 %v1027, %v1035
        %v1040 = vadd.f32 %v1028, %v1036
        %v1041 = vadd.f32 %v1029, %v1037
        %v1042 = vmul.f32 %v1038, 0.8
        %v1043 = vmul.f32 %v1039, 0.8
        %v1044 = vmul.f32 %v1040, 0.8
        %v1045 = vmul.f32 %v1041, 0.8
        %v1046 = vadd.f32 %v1022, %v1042
        %v1047 = vadd.f32 %v1023, %v1043
        %v1048 = vadd.f32 %v1024, %v1044
        %v1049 = vadd.f32 %v1025, %v1045
        %vm1050 = vcmp.ge.f32.partialorder %v540, 0.0
        %vm1051 = vcmp.ge.f32.partialorder %v545, 0.0
        %vm1052 = vcmp.ge.f32.partialorder %v550, 0.0
        %vm1053 = vcmp.ge.f32.partialorder %v555, 0.0
        %v1054 = vmul.f32 %v540, 0.01
        %v1055 = vmul.f32 %v545, 0.01
        %v1056 = vmul.f32 %v550, 0.01
        %v1057 = vmul.f32 %v555, 0.01
        %v1058 = vsel %vm1050, %v540, %v1054
        %v1059 = vsel %vm1051, %v545, %v1055
        %v1060 = vsel %vm1052, %v550, %v1056
        %v1061 = vsel %vm1053, %v555, %v1057
        %v1062 = vld [vmem:[#allocation5 + $0x180] sm:$0xff]
        %v1063 = vld [vmem:[#allocation5 + $0x190] sm:$0xff]
        %v1064 = vld [vmem:[#allocation5 + $0x1a0] sm:$0xff]
        %v1065 = vld [vmem:[#allocation5 + $0x1b0] sm:$0xff]
        %v1066 = vld [vmem:[#allocation5 + $0x1c0] sm:$0xff]
        %v1067 = vld [vmem:[#allocation5 + $0x1d0] sm:$0xff]
        %v1069 = vsel %vm597, %v1046, 0
        %v1072 = vsel %vm597, %v1047, 0
        %v1075 = vsel %vm597, %v1048, 0
        %v1078 = vsel %vm597, %v1049, 0
        %1080 = vmatprep.subr.mxu0 0.0
        %1081 = vmatpush1.msra.mxu0 0.0
        %1082 = vmatprep.subr.mxu0 0.0
        %1083 = vmatpush1.msra.mxu0 0.0
        %1084 = vmatprep.subr.mxu0 0.0
        %1085 = vmatpush1.msra.mxu0 0.0
        %1086 = vmatprep.subr.mxu0 0.0
        %1087 = vmatpush1.msra.mxu0 0.0
        %1088 = vmatprep.subr.mxu0 0.0
        %1089 = vmatpush1.msra.mxu0 0.0
        %1090 = vmatprep.subr.mxu0 0.0
        %1091 = vmatpush1.msra.mxu0 0.0
        %1092 = vmatprep.subr.mxu0 0.0
        %1093 = vmatpush1.msra.mxu0 0.0
        %1094 = vmatprep.subr.mxu0 0.0
        %1095 = vmatpush1.msra.mxu0 0.0
        %1096 = vmatprep.subr.mxu0 0.0
        %1097 = vmatpush1.msra.mxu0 0.0
        %1098 = vmatprep.subr.mxu0 0.0
        %1099 = vmatpush1.msra.mxu0 0.0
        %1100 = vmatprep.subr.mxu0 0.0
        %1101 = vmatpush1.msra.mxu0 %v1067
        %1102 = vmatprep.subr.mxu0 0.0
        %1103 = vmatpush1.msra.mxu0 %v1066
        %1104 = vmatprep.subr.mxu0 0.0
        %1105 = vmatpush1.msra.mxu0 %v1065
        %1106 = vmatprep.subr.mxu0 0.0
        %1107 = vmatpush1.msra.mxu0 %v1064
        %1108 = vmatprep.subr.mxu0 0.0
        %1109 = vmatpush1.msra.mxu0 %v1063
        %1110 = vmatprep.subr.mxu0 0.0
        %1111 = vmatpush1.msra.mxu0 %v1062
        %1112 = vmatprep.subr.mxu0 0.0
        %1113 = vmatpush2.msra.mxu0 0.0
        %1114 = vmatprep.subr.mxu0 0.0
        %1115 = vmatpush2.msra.mxu0 0.0
        %1116 = vmatprep.subr.mxu0 0.0
        %1117 = vmatpush2.msra.mxu0 0.0
        %1118 = vmatprep.subr.mxu0 0.0
        %1119 = vmatpush2.msra.mxu0 0.0
        %1120 = vmatprep.subr.mxu0 0.0
        %1121 = vmatpush2.msra.mxu0 0.0
        %1122 = vmatprep.subr.mxu0 0.0
        %1123 = vmatpush2.msra.mxu0 0.0
        %1124 = vmatprep.subr.mxu0 0.0
        %1125 = vmatpush2.msra.mxu0 0.0
        %1126 = vmatprep.subr.mxu0 0.0
        %1127 = vmatpush2.msra.mxu0 0.0
        %1128 = vmatprep.subr.mxu0 0.0
        %1129 = vmatpush2.msra.mxu0 0.0
        %1130 = vmatprep.subr.mxu0 0.0
        %1131 = vmatpush2.msra.mxu0 0.0
        %1132 = vmatprep.subr.mxu0 0.0
        %1133 = vmatpush2.msra.mxu0 0.0
        %1134 = vmatprep.subr.mxu0 0.0
        %1135 = vmatpush2.msra.mxu0 0.0
        %1136 = vmatprep.subr.mxu0 0.0
        %1137 = vmatpush2.msra.mxu0 0.0
        %1138 = vmatprep.subr.mxu0 0.0
        %1139 = vmatpush2.msra.mxu0 0.0
        %1140 = vmatprep.subr.mxu0 0.0
        %1141 = vmatpush2.msra.mxu0 0.0
        %1142 = vmatprep.subr.mxu0 0.0
        %1143 = vmatpush2.msra.mxu0 0.0
        %1144 = vmatprep.mubr.f32.mxu0 0.0
        %1145 = vmatmul.mubr.f32.gmra.mxu0 %v1069
        %v1146 = vpop.f32.mrf.mxu0
        %v1147 = vadd.f32 0.0, %v1146
        %v1148 = vpop.f32.mrf.mxu0
        %1149 = vmatprep.mubr.f32.mxu0 0.0
        %1150 = vmatmul.mubr.f32.gmra.mxu0 %v1072
        %v1151 = vpop.f32.mrf.mxu0
        %v1152 = vadd.f32 0.0, %v1151
        %v1153 = vpop.f32.mrf.mxu0
        %1154 = vmatprep.mubr.f32.mxu0 0.0
        %1155 = vmatmul.mubr.f32.gmra.mxu0 %v1075
        %v1156 = vpop.f32.mrf.mxu0
        %v1157 = vadd.f32 0.0, %v1156
        %v1158 = vpop.f32.mrf.mxu0
        %1159 = vmatprep.mubr.f32.mxu0 0.0
        %1160 = vmatmul.mubr.f32.gmra.mxu0 %v1078
        %v1161 = vpop.f32.mrf.mxu0
        %v1162 = vadd.f32 0.0, %v1161
        %v1163 = vpop.f32.mrf.mxu0
        %1164 = vdwg.mxu0
        %v1165 = vmul.f32 %v1147, %v1147
        %v1166 = vmul.f32 %v1152, %v1152
        %v1167 = vmul.f32 %v1157, %v1157
        %v1168 = vmul.f32 %v1162, %v1162
        %1173 = vrot.lane.b32.xlu0 %v1165, 112
        %v1174 = vpop.permute.xlu0 %1173
        %1175 = vrot.lane.b32.xlu0 %v1166, 112
        %v1176 = vpop.permute.xlu0 %1175
        %1177 = vrot.lane.b32.xlu0 %v1167, 112
        %v1178 = vpop.permute.xlu0 %1177
        %1179 = vrot.lane.b32.xlu0 %v1168, 112
        %v1180 = vpop.permute.xlu0 %1179
        %v1185 = vadd.f32 %v1165, %v1174
        %v1186 = vadd.f32 %v1166, %v1176
        %v1187 = vadd.f32 %v1167, %v1178
        %v1188 = vadd.f32 %v1168, %v1180
        %1189 = vrot.lane.b32.xlu0 %v1165, 96
        %v1190 = vpop.permute.xlu0 %1189
        %1191 = vrot.lane.b32.xlu0 %v1166, 96
        %v1192 = vpop.permute.xlu0 %1191
        %1193 = vrot.lane.b32.xlu0 %v1167, 96
        %v1194 = vpop.permute.xlu0 %1193
        %1195 = vrot.lane.b32.xlu0 %v1168, 96
        %v1196 = vpop.permute.xlu0 %1195
        %v1201 = vadd.f32 %v1185, %v1190
        %v1202 = vadd.f32 %v1186, %v1192
        %v1203 = vadd.f32 %v1187, %v1194
        %v1204 = vadd.f32 %v1188, %v1196
        %v1205 = vrsqrt.pop %v1201
        %v1206 = vmul.f32 %v1201, %v1205
        %vm1207 = vcmp.eq.f32.partialorder %v1201, inf
        %v1208 = vsel %vm1207, %v1201, %v1206
        %vm1209 = vcmp.eq.f32.partialorder %v1201, 0.0
        %v1210 = vand.u32 %v1201, 2147483648
        %v1211 = vsel %vm1209, %v1210, %v1208
        %v1212 = vrsqrt.pop %v1202
        %v1213 = vmul.f32 %v1202, %v1212
        %vm1214 = vcmp.eq.f32.partialorder %v1202, inf
        %v1215 = vsel %vm1214, %v1202, %v1213
        %vm1216 = vcmp.eq.f32.partialorder %v1202, 0.0
        %v1217 = vand.u32 %v1202, 2147483648
        %v1218 = vsel %vm1216, %v1217, %v1215
        %v1219 = vrsqrt.pop %v1203
        %v1220 = vmul.f32 %v1203, %v1219
        %vm1221 = vcmp.eq.f32.partialorder %v1203, inf
        %v1222 = vsel %vm1221, %v1203, %v1220
        %vm1223 = vcmp.eq.f32.partialorder %v1203, 0.0
        %v1224 = vand.u32 %v1203, 2147483648
        %v1225 = vsel %vm1223, %v1224, %v1222
        %v1226 = vrsqrt.pop %v1204
        %v1227 = vmul.f32 %v1204, %v1226
        %vm1228 = vcmp.eq.f32.partialorder %v1204, inf
        %v1229 = vsel %vm1228, %v1204, %v1227
        %vm1230 = vcmp.eq.f32.partialorder %v1204, 0.0
        %v1231 = vand.u32 %v1204, 2147483648
        %v1232 = vsel %vm1230, %v1231, %v1229
        %v1233 = vld [vmem:[#allocation5 + $0x1e0] sm:$0xff]
        %v1234 = vld [vmem:[#allocation5 + $0x1f0] sm:$0xff]
        %v1235 = vld [vmem:[#allocation5 + $0x200] sm:$0xff]
        %v1236 = vld [vmem:[#allocation5 + $0x210] sm:$0xff]
        %v1237 = vld [vmem:[#allocation5 + $0x220] sm:$0xff]
        %v1238 = vld [vmem:[#allocation5 + $0x230] sm:$0xff]
        %v1240 = vsel %vm366, %v1058, 0
        %v1243 = vsel %vm366, %v1059, 0
        %v1246 = vsel %vm366, %v1060, 0
        %v1249 = vsel %vm366, %v1061, 0
        %1251 = vmatprep.subr.mxu0 0.0
        %1252 = vmatpush1.msra.mxu0 0.0
        %1253 = vmatprep.subr.mxu0 0.0
        %1254 = vmatpush1.msra.mxu0 0.0
        %1255 = vmatprep.subr.mxu0 0.0
        %1256 = vmatpush1.msra.mxu0 0.0
        %1257 = vmatprep.subr.mxu0 0.0
        %1258 = vmatpush1.msra.mxu0 0.0
        %1259 = vmatprep.subr.mxu0 0.0
        %1260 = vmatpush1.msra.mxu0 0.0
        %1261 = vmatprep.subr.mxu0 0.0
        %1262 = vmatpush1.msra.mxu0 0.0
        %1263 = vmatprep.subr.mxu0 0.0
        %1264 = vmatpush1.msra.mxu0 0.0
        %1265 = vmatprep.subr.mxu0 0.0
        %1266 = vmatpush1.msra.mxu0 0.0
        %1267 = vmatprep.subr.mxu0 0.0
        %1268 = vmatpush1.msra.mxu0 0.0
        %1269 = vmatprep.subr.mxu0 0.0
        %1270 = vmatpush1.msra.mxu0 0.0
        %1271 = vmatprep.subr.mxu0 0.0
        %1272 = vmatpush1.msra.mxu0 0.0
        %1273 = vmatprep.subr.mxu0 0.0
        %1274 = vmatpush1.msra.mxu0 0.0
        %1275 = vmatprep.subr.mxu0 0.0
        %1276 = vmatpush1.msra.mxu0 %v1238
        %1277 = vmatprep.subr.mxu0 0.0
        %1278 = vmatpush1.msra.mxu0 %v1237
        %1279 = vmatprep.subr.mxu0 0.0
        %1280 = vmatpush1.msra.mxu0 %v1236
        %1281 = vmatprep.subr.mxu0 0.0
        %1282 = vmatpush1.msra.mxu0 %v1235
        %1283 = vmatprep.subr.mxu0 0.0
        %1284 = vmatpush2.msra.mxu0 0.0
        %1285 = vmatprep.subr.mxu0 0.0
        %1286 = vmatpush2.msra.mxu0 0.0
        %1287 = vmatprep.subr.mxu0 0.0
        %1288 = vmatpush2.msra.mxu0 0.0
        %1289 = vmatprep.subr.mxu0 0.0
        %1290 = vmatpush2.msra.mxu0 0.0
        %1291 = vmatprep.subr.mxu0 0.0
        %1292 = vmatpush2.msra.mxu0 0.0
        %1293 = vmatprep.subr.mxu0 0.0
        %1294 = vmatpush2.msra.mxu0 0.0
        %1295 = vmatprep.subr.mxu0 0.0
        %1296 = vmatpush2.msra.mxu0 0.0
        %1297 = vmatprep.subr.mxu0 0.0
        %1298 = vmatpush2.msra.mxu0 0.0
        %1299 = vmatprep.subr.mxu0 0.0
        %1300 = vmatpush2.msra.mxu0 0.0
        %1301 = vmatprep.subr.mxu0 0.0
        %1302 = vmatpush2.msra.mxu0 0.0
        %1303 = vmatprep.subr.mxu0 0.0
        %1304 = vmatpush2.msra.mxu0 0.0
        %1305 = vmatprep.subr.mxu0 0.0
        %1306 = vmatpush2.msra.mxu0 0.0
        %1307 = vmatprep.subr.mxu0 0.0
        %1308 = vmatpush2.msra.mxu0 0.0
        %1309 = vmatprep.subr.mxu0 0.0
        %1310 = vmatpush2.msra.mxu0 0.0
        %1311 = vmatprep.subr.mxu0 0.0
        %1312 = vmatpush2.msra.mxu0 0.0
        %1313 = vmatprep.subr.mxu0 0.0
        %1314 = vmatpush2.msra.mxu0 0.0
        %1315 = vmatprep.mubr.f32.mxu0 0.0
        %1316 = vmatmul.mubr.f32.gmra.mxu0 %v1240
        %v1317 = vpop.f32.mrf.mxu0
        %v1318 = vadd.f32 0.0, %v1317
        %v1319 = vpop.f32.mrf.mxu0
        %1320 = vmatprep.mubr.f32.mxu0 0.0
        %1321 = vmatmul.mubr.f32.gmra.mxu0 %v1243
        %v1322 = vpop.f32.mrf.mxu0
        %v1323 = vadd.f32 0.0, %v1322
        %v1324 = vpop.f32.mrf.mxu0
        %1325 = vmatprep.mubr.f32.mxu0 0.0
        %1326 = vmatmul.mubr.f32.gmra.mxu0 %v1246
        %v1327 = vpop.f32.mrf.mxu0
        %v1328 = vadd.f32 0.0, %v1327
        %v1329 = vpop.f32.mrf.mxu0
        %1330 = vmatprep.mubr.f32.mxu0 0.0
        %1331 = vmatmul.mubr.f32.gmra.mxu0 %v1249
        %v1332 = vpop.f32.mrf.mxu0
        %v1333 = vadd.f32 0.0, %v1332
        %v1334 = vpop.f32.mrf.mxu0
        %1335 = vdwg.mxu0
        %v1337 = vsel %vm460, %v1211, 0
        %v1340 = vsel %vm460, %v1218, 0
        %v1343 = vsel %vm460, %v1225, 0
        %v1346 = vsel %vm460, %v1232, 0
        %1348 = vmatprep.subr.mxu0 0.0
        %1349 = vmatpush1.msra.mxu0 0.0
        %1350 = vmatprep.subr.mxu0 0.0
        %1351 = vmatpush1.msra.mxu0 0.0
        %1352 = vmatprep.subr.mxu0 0.0
        %1353 = vmatpush1.msra.mxu0 0.0
        %1354 = vmatprep.subr.mxu0 0.0
        %1355 = vmatpush1.msra.mxu0 0.0
        %1356 = vmatprep.subr.mxu0 0.0
        %1357 = vmatpush1.msra.mxu0 0.0
        %1358 = vmatprep.subr.mxu0 0.0
        %1359 = vmatpush1.msra.mxu0 0.0
        %1360 = vmatprep.subr.mxu0 0.0
        %1361 = vmatpush1.msra.mxu0 0.0
        %1362 = vmatprep.subr.mxu0 0.0
        %1363 = vmatpush1.msra.mxu0 0.0
        %1364 = vmatprep.subr.mxu0 0.0
        %1365 = vmatpush1.msra.mxu0 0.0
        %1366 = vmatprep.subr.mxu0 0.0
        %1367 = vmatpush1.msra.mxu0 0.0
        %1368 = vmatprep.subr.mxu0 0.0
        %1369 = vmatpush1.msra.mxu0 0.0
        %1370 = vmatprep.subr.mxu0 0.0
        %1371 = vmatpush1.msra.mxu0 0.0
        %1372 = vmatprep.subr.mxu0 0.0
        %1373 = vmatpush1.msra.mxu0 0.0
        %1374 = vmatprep.subr.mxu0 0.0
        %1375 = vmatpush1.msra.mxu0 0.0
        %1376 = vmatprep.subr.mxu0 0.0
        %1377 = vmatpush1.msra.mxu0 %v1234
        %1378 = vmatprep.subr.mxu0 0.0
        %1379 = vmatpush1.msra.mxu0 %v1233
        %1380 = vmatprep.subr.mxu0 0.0
        %1381 = vmatpush2.msra.mxu0 0.0
        %1382 = vmatprep.subr.mxu0 0.0
        %1383 = vmatpush2.msra.mxu0 0.0
        %1384 = vmatprep.subr.mxu0 0.0
        %1385 = vmatpush2.msra.mxu0 0.0
        %1386 = vmatprep.subr.mxu0 0.0
        %1387 = vmatpush2.msra.mxu0 0.0
        %1388 = vmatprep.subr.mxu0 0.0
        %1389 = vmatpush2.msra.mxu0 0.0
        %1390 = vmatprep.subr.mxu0 0.0
        %1391 = vmatpush2.msra.mxu0 0.0
        %1392 = vmatprep.subr.mxu0 0.0
        %1393 = vmatpush2.msra.mxu0 0.0
        %1394 = vmatprep.subr.mxu0 0.0
        %1395 = vmatpush2.msra.mxu0 0.0
        %1396 = vmatprep.subr.mxu0 0.0
        %1397 = vmatpush2.msra.mxu0 0.0
        %1398 = vmatprep.subr.mxu0 0.0
        %1399 = vmatpush2.msra.mxu0 0.0
        %1400 = vmatprep.subr.mxu0 0.0
        %1401 = vmatpush2.msra.mxu0 0.0
        %1402 = vmatprep.subr.mxu0 0.0
        %1403 = vmatpush2.msra.mxu0 0.0
        %1404 = vmatprep.subr.mxu0 0.0
        %1405 = vmatpush2.msra.mxu0 0.0
        %1406 = vmatprep.subr.mxu0 0.0
        %1407 = vmatpush2.msra.mxu0 0.0
        %1408 = vmatprep.subr.mxu0 0.0
        %1409 = vmatpush2.msra.mxu0 0.0
        %1410 = vmatprep.subr.mxu0 0.0
        %1411 = vmatpush2.msra.mxu0 0.0
        %1412 = vmatprep.mubr.f32.mxu0 0.0
        %1413 = vmatmul.mubr.f32.gmra.mxu0 %v1337
        %v1414 = vpop.f32.mrf.mxu0
        %v1415 = vadd.f32 %v1318, %v1414
        %v1416 = vpop.f32.mrf.mxu0
        %1417 = vmatprep.mubr.f32.mxu0 0.0
        %1418 = vmatmul.mubr.f32.gmra.mxu0 %v1340
        %v1419 = vpop.f32.mrf.mxu0
        %v1420 = vadd.f32 %v1323, %v1419
        %v1421 = vpop.f32.mrf.mxu0
        %1422 = vmatprep.mubr.f32.mxu0 0.0
        %1423 = vmatmul.mubr.f32.gmra.mxu0 %v1343
        %v1424 = vpop.f32.mrf.mxu0
        %v1425 = vadd.f32 %v1328, %v1424
        %v1426 = vpop.f32.mrf.mxu0
        %1427 = vmatprep.mubr.f32.mxu0 0.0
        %1428 = vmatmul.mubr.f32.gmra.mxu0 %v1346
        %v1429 = vpop.f32.mrf.mxu0
        %v1430 = vadd.f32 %v1333, %v1429
        %v1431 = vpop.f32.mrf.mxu0
        %1432 = vdwg.mxu0
        %v1433 = vld [vmem:[#allocation5 + $0x240] ss:$0 sm:$0xff]
        %1435 = vrot.lane.b32.xlu0 %v1433, 32
        %v1436 = vpop.permute.xlu0 %1435
        %v1438 = vadd.f32 %v1415, %v1436
        %v1439 = vadd.f32 %v1420, %v1436
        %v1440 = vadd.f32 %v1425, %v1436
        %v1441 = vadd.f32 %v1430, %v1436
        %v1442 = vxor.u32 %v1438, 2147483648
        %v1443 = vxor.u32 %v1439, 2147483648
        %v1444 = vxor.u32 %v1440, 2147483648
        %v1445 = vxor.u32 %v1441, 2147483648
        %v1446 = vmul.f32 %v1442, 1.442695
        %v1447 = vpow.pop %v1446
        %v1448 = vmul.f32 %v1443, 1.442695
        %v1449 = vpow.pop %v1448
        %v1450 = vmul.f32 %v1444, 1.442695
        %v1451 = vpow.pop %v1450
        %v1452 = vmul.f32 %v1445, 1.442695
        %v1453 = vpow.pop %v1452
        %v1454 = vadd.f32 %v1447, 1.0
        %v1455 = vadd.f32 %v1449, 1.0
        %v1456 = vadd.f32 %v1451, 1.0
        %v1457 = vadd.f32 %v1453, 1.0
        %v1458 = vrcp.pop %v1454
        %v1459 = vmul.f32 1.0, %v1458
        %v1460 = vrcp.pop %v1455
        %v1461 = vmul.f32 1.0, %v1460
        %v1462 = vrcp.pop %v1456
        %v1463 = vmul.f32 1.0, %v1462
        %v1464 = vrcp.pop %v1457
        %v1465 = vmul.f32 1.0, %v1464
        %v1466 = vld [vmem:[#allocation5 + $0x260] sm:$0xff]
        %v1467 = vld [vmem:[#allocation5 + $0x270] sm:$0xff]
        %v1468 = vld [vmem:[#allocation5 + $0x280] sm:$0xff]
        %v1469 = vld [vmem:[#allocation5 + $0x290] sm:$0xff]
        %v1470 = vld [vmem:[#allocation5 + $0x2a0] sm:$0xff]
        %v1471 = vld [vmem:[#allocation5 + $0x2b0] sm:$0xff]
        %v1473 = vsel %vm597, %v1147, 0
        %v1476 = vsel %vm597, %v1152, 0
        %v1479 = vsel %vm597, %v1157, 0
        %v1482 = vsel %vm597, %v1162, 0
        %1484 = vmatprep.subr.mxu0 0.0
        %1485 = vmatpush1.msra.mxu0 0.0
        %1486 = vmatprep.subr.mxu0 0.0
        %1487 = vmatpush1.msra.mxu0 0.0
        %1488 = vmatprep.subr.mxu0 0.0
        %1489 = vmatpush1.msra.mxu0 0.0
        %1490 = vmatprep.subr.mxu0 0.0
        %1491 = vmatpush1.msra.mxu0 0.0
        %1492 = vmatprep.subr.mxu0 0.0
        %1493 = vmatpush1.msra.mxu0 0.0
        %1494 = vmatprep.subr.mxu0 0.0
        %1495 = vmatpush1.msra.mxu0 0.0
        %1496 = vmatprep.subr.mxu0 0.0
        %1497 = vmatpush1.msra.mxu0 0.0
        %1498 = vmatprep.subr.mxu0 0.0
        %1499 = vmatpush1.msra.mxu0 0.0
        %1500 = vmatprep.subr.mxu0 0.0
        %1501 = vmatpush1.msra.mxu0 0.0
        %1502 = vmatprep.subr.mxu0 0.0
        %1503 = vmatpush1.msra.mxu0 0.0
        %1504 = vmatprep.subr.mxu0 0.0
        %1505 = vmatpush1.msra.mxu0 %v1471
        %1506 = vmatprep.subr.mxu0 0.0
        %1507 = vmatpush1.msra.mxu0 %v1470
        %1508 = vmatprep.subr.mxu0 0.0
        %1509 = vmatpush1.msra.mxu0 %v1469
        %1510 = vmatprep.subr.mxu0 0.0
        %1511 = vmatpush1.msra.mxu0 %v1468
        %1512 = vmatprep.subr.mxu0 0.0
        %1513 = vmatpush1.msra.mxu0 %v1467
        %1514 = vmatprep.subr.mxu0 0.0
        %1515 = vmatpush1.msra.mxu0 %v1466
        %1516 = vmatprep.subr.mxu0 0.0
        %1517 = vmatpush2.msra.mxu0 0.0
        %1518 = vmatprep.subr.mxu0 0.0
        %1519 = vmatpush2.msra.mxu0 0.0
        %1520 = vmatprep.subr.mxu0 0.0
        %1521 = vmatpush2.msra.mxu0 0.0
        %1522 = vmatprep.subr.mxu0 0.0
        %1523 = vmatpush2.msra.mxu0 0.0
        %1524 = vmatprep.subr.mxu0 0.0
        %1525 = vmatpush2.msra.mxu0 0.0
        %1526 = vmatprep.subr.mxu0 0.0
        %1527 = vmatpush2.msra.mxu0 0.0
        %1528 = vmatprep.subr.mxu0 0.0
        %1529 = vmatpush2.msra.mxu0 0.0
        %1530 = vmatprep.subr.mxu0 0.0
        %1531 = vmatpush2.msra.mxu0 0.0
        %1532 = vmatprep.subr.mxu0 0.0
        %1533 = vmatpush2.msra.mxu0 0.0
        %1534 = vmatprep.subr.mxu0 0.0
        %1535 = vmatpush2.msra.mxu0 0.0
        %1536 = vmatprep.subr.mxu0 0.0
        %1537 = vmatpush2.msra.mxu0 0.0
        %1538 = vmatprep.subr.mxu0 0.0
        %1539 = vmatpush2.msra.mxu0 0.0
        %1540 = vmatprep.subr.mxu0 0.0
        %1541 = vmatpush2.msra.mxu0 0.0
        %1542 = vmatprep.subr.mxu0 0.0
        %1543 = vmatpush2.msra.mxu0 0.0
        %1544 = vmatprep.subr.mxu0 0.0
        %1545 = vmatpush2.msra.mxu0 0.0
        %1546 = vmatprep.subr.mxu0 0.0
        %1547 = vmatpush2.msra.mxu0 0.0
        %1548 = vmatprep.mubr.f32.mxu0 0.0
        %1549 = vmatmul.mubr.f32.gmra.mxu0 %v1473
        %v1550 = vpop.f32.mrf.mxu0
        %v1551 = vadd.f32 0.0, %v1550
        %v1552 = vpop.f32.mrf.mxu0
        %1553 = vmatprep.mubr.f32.mxu0 0.0
        %1554 = vmatmul.mubr.f32.gmra.mxu0 %v1476
        %v1555 = vpop.f32.mrf.mxu0
        %v1556 = vadd.f32 0.0, %v1555
        %v1557 = vpop.f32.mrf.mxu0
        %1558 = vmatprep.mubr.f32.mxu0 0.0
        %1559 = vmatmul.mubr.f32.gmra.mxu0 %v1479
        %v1560 = vpop.f32.mrf.mxu0
        %v1561 = vadd.f32 0.0, %v1560
        %v1562 = vpop.f32.mrf.mxu0
        %1563 = vmatprep.mubr.f32.mxu0 0.0
        %1564 = vmatmul.mubr.f32.gmra.mxu0 %v1482
        %v1565 = vpop.f32.mrf.mxu0
        %v1566 = vadd.f32 0.0, %v1565
        %v1567 = vpop.f32.mrf.mxu0
        %1568 = vdwg.mxu0
        %1573 = vrot.lane.b32.xlu0 %v1459, 96
        %v1574 = vpop.permute.xlu0 %1573
        %1575 = vrot.lane.b32.xlu0 %v1461, 96
        %v1576 = vpop.permute.xlu0 %1575
        %1577 = vrot.lane.b32.xlu0 %v1463, 96
        %v1578 = vpop.permute.xlu0 %1577
        %1579 = vrot.lane.b32.xlu0 %v1465, 96
        %v1580 = vpop.permute.xlu0 %1579
        %1585 = vrot.lane.b32.xlu0 %v1459, 112
        %v1586 = vpop.permute.xlu0 %1585
        %1587 = vrot.lane.b32.xlu0 %v1461, 112
        %v1588 = vpop.permute.xlu0 %1587
        %1589 = vrot.lane.b32.xlu0 %v1463, 112
        %v1590 = vpop.permute.xlu0 %1589
        %1591 = vrot.lane.b32.xlu0 %v1465, 112
        %v1592 = vpop.permute.xlu0 %1591
        %v1597 = vsel %vm460, %v1574, %v1586
        %v1598 = vsel %vm460, %v1576, %v1588
        %v1599 = vsel %vm460, %v1578, %v1590
        %v1600 = vsel %vm460, %v1580, %v1592
        %v1601 = vsel %vm366, %v1597, %v1459
        %v1602 = vsel %vm366, %v1598, %v1461
        %v1603 = vsel %vm366, %v1599, %v1463
        %v1604 = vsel %vm366, %v1600, %v1465
        %v1605 = vmul.f32 %v1551, %v1601
        %v1606 = vmul.f32 %v1556, %v1602
        %v1607 = vmul.f32 %v1561, %v1603
        %v1608 = vmul.f32 %v1566, %v1604
        %v1609 = vld [vmem:[#allocation5 + $0x2c0] sm:$0xff]
        %v1610 = vld [vmem:[#allocation5 + $0x2c8] sm:$0xff]
        %v1611 = vld [vmem:[#allocation5 + $0x2d0] sm:$0xff]
        %v1612 = vld [vmem:[#allocation5 + $0x2d8] sm:$0xff]
        %v1613 = vld [vmem:[#allocation5 + $0x2e0] sm:$0xff]
        %v1614 = vld [vmem:[#allocation5 + $0x2e8] sm:$0xff]
        %v1615 = vld [vmem:[#allocation5 + $0x2f0] sm:$0xff]
        %v1616 = vld [vmem:[#allocation5 + $0x2f8] sm:$0xff]
        %v1617 = vld [vmem:[#allocation5 + $0x300] sm:$0xff]
        %v1618 = vld [vmem:[#allocation5 + $0x308] sm:$0xff]
        %v1619 = vld [vmem:[#allocation5 + $0x310] sm:$0xff]
        %v1620 = vld [vmem:[#allocation5 + $0x318] sm:$0xff]
        %v1622 = vsel %vm597, %v1605, 0
        %v1625 = vsel %vm597, %v1606, 0
        %v1628 = vsel %vm597, %v1607, 0
        %v1631 = vsel %vm597, %v1608, 0
        %1633 = vmatprep.subr.mxu0 0.0
        %1634 = vmatpush1.msra.mxu0 0.0
        %1635 = vmatprep.subr.mxu0 0.0
        %1636 = vmatpush1.msra.mxu0 0.0
        %1637 = vmatprep.subr.mxu0 0.0
        %1638 = vmatpush1.msra.mxu0 0.0
        %1639 = vmatprep.subr.mxu0 0.0
        %1640 = vmatpush1.msra.mxu0 0.0
        %1641 = vmatprep.subr.mxu0 0.0
        %1642 = vmatpush1.msra.mxu0 0.0
        %1643 = vmatprep.subr.mxu0 0.0
        %1644 = vmatpush1.msra.mxu0 0.0
        %1645 = vmatprep.subr.mxu0 0.0
        %1646 = vmatpush1.msra.mxu0 0.0
        %1647 = vmatprep.subr.mxu0 0.0
        %1648 = vmatpush1.msra.mxu0 0.0
        %1649 = vmatprep.subr.mxu0 0.0
        %1650 = vmatpush1.msra.mxu0 0.0
        %1651 = vmatprep.subr.mxu0 0.0
        %1652 = vmatpush1.msra.mxu0 0.0
        %1653 = vmatprep.subr.mxu0 %v1620
        %1654 = vmatpush1.msra.mxu0 %v1619
        %1655 = vmatprep.subr.mxu0 %v1618
        %1656 = vmatpush1.msra.mxu0 %v1617
        %1657 = vmatprep.subr.mxu0 %v1616
        %1658 = vmatpush1.msra.mxu0 %v1615
        %1659 = vmatprep.subr.mxu0 %v1614
        %1660 = vmatpush1.msra.mxu0 %v1613
        %1661 = vmatprep.subr.mxu0 %v1612
        %1662 = vmatpush1.msra.mxu0 %v1611
        %1663 = vmatprep.subr.mxu0 %v1610
        %1664 = vmatpush1.msra.mxu0 %v1609
        %1665 = vmatprep.subr.mxu0 0.0
        %1666 = vmatpush2.msra.mxu0 0.0
        %1667 = vmatprep.subr.mxu0 0.0
        %1668 = vmatpush2.msra.mxu0 0.0
        %1669 = vmatprep.subr.mxu0 0.0
        %1670 = vmatpush2.msra.mxu0 0.0
        %1671 = vmatprep.subr.mxu0 0.0
        %1672 = vmatpush2.msra.mxu0 0.0
        %1673 = vmatprep.subr.mxu0 0.0
        %1674 = vmatpush2.msra.mxu0 0.0
        %1675 = vmatprep.subr.mxu0 0.0
        %1676 = vmatpush2.msra.mxu0 0.0
        %1677 = vmatprep.subr.mxu0 0.0
        %1678 = vmatpush2.msra.mxu0 0.0
        %1679 = vmatprep.subr.mxu0 0.0
        %1680 = vmatpush2.msra.mxu0 0.0
        %1681 = vmatprep.subr.mxu0 0.0
        %1682 = vmatpush2.msra.mxu0 0.0
        %1683 = vmatprep.subr.mxu0 0.0
        %1684 = vmatpush2.msra.mxu0 0.0
        %1685 = vmatprep.subr.mxu0 0.0
        %1686 = vmatpush2.msra.mxu0 0.0
        %1687 = vmatprep.subr.mxu0 0.0
        %1688 = vmatpush2.msra.mxu0 0.0
        %1689 = vmatprep.subr.mxu0 0.0
        %1690 = vmatpush2.msra.mxu0 0.0
        %1691 = vmatprep.subr.mxu0 0.0
        %1692 = vmatpush2.msra.mxu0 0.0
        %1693 = vmatprep.subr.mxu0 0.0
        %1694 = vmatpush2.msra.mxu0 0.0
        %1695 = vmatprep.subr.mxu0 0.0
        %1696 = vmatpush2.msra.mxu0 0.0
        %1697 = vmatprep.mubr.f32.mxu0 0.0
        %1698 = vmatmul.mubr.f32.gmra.mxu0 %v1622
        %v1699 = vpop.f32.mrf.mxu0
        %v1700 = vadd.f32 0.0, %v1699
        %v1701 = vpop.f32.mrf.mxu0
        %v1702 = vadd.f32 0.0, %v1701
        %1703 = vmatprep.mubr.f32.mxu0 0.0
        %1704 = vmatmul.mubr.f32.gmra.mxu0 %v1625
        %v1705 = vpop.f32.mrf.mxu0
        %v1706 = vadd.f32 0.0, %v1705
        %v1707 = vpop.f32.mrf.mxu0
        %v1708 = vadd.f32 0.0, %v1707
        %1709 = vmatprep.mubr.f32.mxu0 0.0
        %1710 = vmatmul.mubr.f32.gmra.mxu0 %v1628
        %v1711 = vpop.f32.mrf.mxu0
        %v1712 = vadd.f32 0.0, %v1711
        %v1713 = vpop.f32.mrf.mxu0
        %v1714 = vadd.f32 0.0, %v1713
        %1715 = vmatprep.mubr.f32.mxu0 0.0
        %1716 = vmatmul.mubr.f32.gmra.mxu0 %v1631
        %v1717 = vpop.f32.mrf.mxu0
        %v1718 = vadd.f32 0.0, %v1717
        %v1719 = vpop.f32.mrf.mxu0
        %v1720 = vadd.f32 0.0, %v1719
        %1721 = vdwg.mxu0
        %v1722 = vmul.f32 %v1700, %v1700
        %v1723 = vmul.f32 %v1706, %v1706
        %v1724 = vmul.f32 %v1712, %v1712
        %v1725 = vmul.f32 %v1718, %v1718
        %1730 = vrot.lane.b32.xlu0 %v1722, 80
        %v1731 = vpop.permute.xlu0 %1730
        %1732 = vrot.lane.b32.xlu0 %v1723, 80
        %v1733 = vpop.permute.xlu0 %1732
        %1734 = vrot.lane.b32.xlu0 %v1724, 80
        %v1735 = vpop.permute.xlu0 %1734
        %1736 = vrot.lane.b32.xlu0 %v1725, 80
        %v1737 = vpop.permute.xlu0 %1736
        %v1742 = vadd.f32 %v1722, %v1731
        %v1743 = vadd.f32 %v1723, %v1733
        %v1744 = vadd.f32 %v1724, %v1735
        %v1745 = vadd.f32 %v1725, %v1737
        %v1746 = vmul.f32 %v1702, %v1702
        %v1747 = vmul.f32 %v1708, %v1708
        %v1748 = vmul.f32 %v1714, %v1714
        %v1749 = vmul.f32 %v1720, %v1720
        %1754 = vrot.lane.b32.xlu0 %v1722, 32
        %v1755 = vpop.permute.xlu0 %1754
        %1756 = vrot.lane.b32.xlu0 %v1746, 32
        %v1757 = vpop.permute.xlu0 %1756
        %1758 = vrot.lane.b32.xlu0 %v1723, 32
        %v1759 = vpop.permute.xlu0 %1758
        %1760 = vrot.lane.b32.xlu0 %v1747, 32
        %v1761 = vpop.permute.xlu0 %1760
        %1762 = vrot.lane.b32.xlu0 %v1724, 32
        %v1763 = vpop.permute.xlu0 %1762
        %1764 = vrot.lane.b32.xlu0 %v1748, 32
        %v1765 = vpop.permute.xlu0 %1764
        %1766 = vrot.lane.b32.xlu0 %v1725, 32
        %v1767 = vpop.permute.xlu0 %1766
        %1768 = vrot.lane.b32.xlu0 %v1749, 32
        %v1769 = vpop.permute.xlu0 %1768
        %v1770 = vsel %vm366, %v1755, %v1757
        %v1771 = vsel %vm366, %v1759, %v1761
        %v1772 = vsel %vm366, %v1763, %v1765
        %v1773 = vsel %vm366, %v1767, %v1769
        %v1778 = vadd.f32 %v1742, %v1770
        %v1779 = vadd.f32 %v1743, %v1771
        %v1780 = vadd.f32 %v1744, %v1772
        %v1781 = vadd.f32 %v1745, %v1773
        %v1782 = vrsqrt.pop %v1778
        %v1783 = vmul.f32 %v1778, %v1782
        %vm1784 = vcmp.eq.f32.partialorder %v1778, inf
        %v1785 = vsel %vm1784, %v1778, %v1783
        %vm1786 = vcmp.eq.f32.partialorder %v1778, 0.0
        %v1787 = vand.u32 %v1778, 2147483648
        %v1788 = vsel %vm1786, %v1787, %v1785
        %v1789 = vrsqrt.pop %v1779
        %v1790 = vmul.f32 %v1779, %v1789
        %vm1791 = vcmp.eq.f32.partialorder %v1779, inf
        %v1792 = vsel %vm1791, %v1779, %v1790
        %vm1793 = vcmp.eq.f32.partialorder %v1779, 0.0
        %v1794 = vand.u32 %v1779, 2147483648
        %v1795 = vsel %vm1793, %v1794, %v1792
        %v1796 = vrsqrt.pop %v1780
        %v1797 = vmul.f32 %v1780, %v1796
        %vm1798 = vcmp.eq.f32.partialorder %v1780, inf
        %v1799 = vsel %vm1798, %v1780, %v1797
        %vm1800 = vcmp.eq.f32.partialorder %v1780, 0.0
        %v1801 = vand.u32 %v1780, 2147483648
        %v1802 = vsel %vm1800, %v1801, %v1799
        %v1803 = vrsqrt.pop %v1781
        %v1804 = vmul.f32 %v1781, %v1803
        %vm1805 = vcmp.eq.f32.partialorder %v1781, inf
        %v1806 = vsel %vm1805, %v1781, %v1804
        %vm1807 = vcmp.eq.f32.partialorder %v1781, 0.0
        %v1808 = vand.u32 %v1781, 2147483648
        %v1809 = vsel %vm1807, %v1808, %v1806
        %v1810 = vld [vmem:[#allocation5 + $0x320] sm:$0xff]
        %v1811 = vld [vmem:[#allocation5 + $0x330] sm:$0xff]
        %v1812 = vld [vmem:[#allocation5 + $0x340] sm:$0xff]
        %v1813 = vld [vmem:[#allocation5 + $0x350] sm:$0xff]
        %v1814 = vld [vmem:[#allocation5 + $0x360] sm:$0xff]
        %v1815 = vld [vmem:[#allocation5 + $0x370] sm:$0xff]
        %v1816 = vld [vmem:[#allocation5 + $0x380] sm:$0xff]
        %v1817 = vld [vmem:[#allocation5 + $0x390] sm:$0xff]
        %v1818 = vld [vmem:[#allocation5 + $0x3a0] sm:$0xff]
        %v1819 = vld [vmem:[#allocation5 + $0x3b0] sm:$0xff]
        %v1821 = vsel %vm366, %v1415, 0
        %v1824 = vsel %vm366, %v1420, 0
        %v1827 = vsel %vm366, %v1425, 0
        %v1830 = vsel %vm366, %v1430, 0
        %1832 = vmatprep.subr.mxu0 0.0
        %1833 = vmatpush1.msra.mxu0 0.0
        %1834 = vmatprep.subr.mxu0 0.0
        %1835 = vmatpush1.msra.mxu0 0.0
        %1836 = vmatprep.subr.mxu0 0.0
        %1837 = vmatpush1.msra.mxu0 0.0
        %1838 = vmatprep.subr.mxu0 0.0
        %1839 = vmatpush1.msra.mxu0 0.0
        %1840 = vmatprep.subr.mxu0 0.0
        %1841 = vmatpush1.msra.mxu0 0.0
        %1842 = vmatprep.subr.mxu0 0.0
        %1843 = vmatpush1.msra.mxu0 0.0
        %1844 = vmatprep.subr.mxu0 0.0
        %1845 = vmatpush1.msra.mxu0 0.0
        %1846 = vmatprep.subr.mxu0 0.0
        %1847 = vmatpush1.msra.mxu0 0.0
        %1848 = vmatprep.subr.mxu0 0.0
        %1849 = vmatpush1.msra.mxu0 0.0
        %1850 = vmatprep.subr.mxu0 0.0
        %1851 = vmatpush1.msra.mxu0 0.0
        %1852 = vmatprep.subr.mxu0 0.0
        %1853 = vmatpush1.msra.mxu0 0.0
        %1854 = vmatprep.subr.mxu0 0.0
        %1855 = vmatpush1.msra.mxu0 0.0
        %1856 = vmatprep.subr.mxu0 0.0
        %1857 = vmatpush1.msra.mxu0 %v1819
        %1858 = vmatprep.subr.mxu0 0.0
        %1859 = vmatpush1.msra.mxu0 %v1818
        %1860 = vmatprep.subr.mxu0 0.0
        %1861 = vmatpush1.msra.mxu0 %v1817
        %1862 = vmatprep.subr.mxu0 0.0
        %1863 = vmatpush1.msra.mxu0 %v1816
        %1864 = vmatprep.subr.mxu0 0.0
        %1865 = vmatpush2.msra.mxu0 0.0
        %1866 = vmatprep.subr.mxu0 0.0
        %1867 = vmatpush2.msra.mxu0 0.0
        %1868 = vmatprep.subr.mxu0 0.0
        %1869 = vmatpush2.msra.mxu0 0.0
        %1870 = vmatprep.subr.mxu0 0.0
        %1871 = vmatpush2.msra.mxu0 0.0
        %1872 = vmatprep.subr.mxu0 0.0
        %1873 = vmatpush2.msra.mxu0 0.0
        %1874 = vmatprep.subr.mxu0 0.0
        %1875 = vmatpush2.msra.mxu0 0.0
        %1876 = vmatprep.subr.mxu0 0.0
        %1877 = vmatpush2.msra.mxu0 0.0
        %1878 = vmatprep.subr.mxu0 0.0
        %1879 = vmatpush2.msra.mxu0 0.0
        %1880 = vmatprep.subr.mxu0 0.0
        %1881 = vmatpush2.msra.mxu0 0.0
        %1882 = vmatprep.subr.mxu0 0.0
        %1883 = vmatpush2.msra.mxu0 0.0
        %1884 = vmatprep.subr.mxu0 0.0
        %1885 = vmatpush2.msra.mxu0 0.0
        %1886 = vmatprep.subr.mxu0 0.0
        %1887 = vmatpush2.msra.mxu0 0.0
        %1888 = vmatprep.subr.mxu0 0.0
        %1889 = vmatpush2.msra.mxu0 0.0
        %1890 = vmatprep.subr.mxu0 0.0
        %1891 = vmatpush2.msra.mxu0 0.0
        %1892 = vmatprep.subr.mxu0 0.0
        %1893 = vmatpush2.msra.mxu0 0.0
        %1894 = vmatprep.subr.mxu0 0.0
        %1895 = vmatpush2.msra.mxu0 0.0
        %1896 = vmatprep.mubr.f32.mxu0 0.0
        %1897 = vmatmul.mubr.f32.gmra.mxu0 %v1821
        %v1898 = vpop.f32.mrf.mxu0
        %v1899 = vadd.f32 0.0, %v1898
        %v1900 = vpop.f32.mrf.mxu0
        %1901 = vmatprep.mubr.f32.mxu0 0.0
        %1902 = vmatmul.mubr.f32.gmra.mxu0 %v1824
        %v1903 = vpop.f32.mrf.mxu0
        %v1904 = vadd.f32 0.0, %v1903
        %v1905 = vpop.f32.mrf.mxu0
        %1906 = vmatprep.mubr.f32.mxu0 0.0
        %1907 = vmatmul.mubr.f32.gmra.mxu0 %v1827
        %v1908 = vpop.f32.mrf.mxu0
        %v1909 = vadd.f32 0.0, %v1908
        %v1910 = vpop.f32.mrf.mxu0
        %1911 = vmatprep.mubr.f32.mxu0 0.0
        %1912 = vmatmul.mubr.f32.gmra.mxu0 %v1830
        %v1913 = vpop.f32.mrf.mxu0
        %v1914 = vadd.f32 0.0, %v1913
        %v1915 = vpop.f32.mrf.mxu0
        %1916 = vdwg.mxu0
        %v1918 = vsel %vm597, %v1788, 0
        %v1921 = vsel %vm597, %v1795, 0
        %v1924 = vsel %vm597, %v1802, 0
        %v1927 = vsel %vm597, %v1809, 0
        %1929 = vmatprep.subr.mxu0 0.0
        %1930 = vmatpush1.msra.mxu0 0.0
        %1931 = vmatprep.subr.mxu0 0.0
        %1932 = vmatpush1.msra.mxu0 0.0
        %1933 = vmatprep.subr.mxu0 0.0
        %1934 = vmatpush1.msra.mxu0 0.0
        %1935 = vmatprep.subr.mxu0 0.0
        %1936 = vmatpush1.msra.mxu0 0.0
        %1937 = vmatprep.subr.mxu0 0.0
        %1938 = vmatpush1.msra.mxu0 0.0
        %1939 = vmatprep.subr.mxu0 0.0
        %1940 = vmatpush1.msra.mxu0 0.0
        %1941 = vmatprep.subr.mxu0 0.0
        %1942 = vmatpush1.msra.mxu0 0.0
        %1943 = vmatprep.subr.mxu0 0.0
        %1944 = vmatpush1.msra.mxu0 0.0
        %1945 = vmatprep.subr.mxu0 0.0
        %1946 = vmatpush1.msra.mxu0 0.0
        %1947 = vmatprep.subr.mxu0 0.0
        %1948 = vmatpush1.msra.mxu0 0.0
        %1949 = vmatprep.subr.mxu0 0.0
        %1950 = vmatpush1.msra.mxu0 %v1815
        %1951 = vmatprep.subr.mxu0 0.0
        %1952 = vmatpush1.msra.mxu0 %v1814
        %1953 = vmatprep.subr.mxu0 0.0
        %1954 = vmatpush1.msra.mxu0 %v1813
        %1955 = vmatprep.subr.mxu0 0.0
        %1956 = vmatpush1.msra.mxu0 %v1812
        %1957 = vmatprep.subr.mxu0 0.0
        %1958 = vmatpush1.msra.mxu0 %v1811
        %1959 = vmatprep.subr.mxu0 0.0
        %1960 = vmatpush1.msra.mxu0 %v1810
        %1961 = vmatprep.subr.mxu0 0.0
        %1962 = vmatpush2.msra.mxu0 0.0
        %1963 = vmatprep.subr.mxu0 0.0
        %1964 = vmatpush2.msra.mxu0 0.0
        %1965 = vmatprep.subr.mxu0 0.0
        %1966 = vmatpush2.msra.mxu0 0.0
        %1967 = vmatprep.subr.mxu0 0.0
        %1968 = vmatpush2.msra.mxu0 0.0
        %1969 = vmatprep.subr.mxu0 0.0
        %1970 = vmatpush2.msra.mxu0 0.0
        %1971 = vmatprep.subr.mxu0 0.0
        %1972 = vmatpush2.msra.mxu0 0.0
        %1973 = vmatprep.subr.mxu0 0.0
        %1974 = vmatpush2.msra.mxu0 0.0
        %1975 = vmatprep.subr.mxu0 0.0
        %1976 = vmatpush2.msra.mxu0 0.0
        %1977 = vmatprep.subr.mxu0 0.0
        %1978 = vmatpush2.msra.mxu0 0.0
        %1979 = vmatprep.subr.mxu0 0.0
        %1980 = vmatpush2.msra.mxu0 0.0
        %1981 = vmatprep.subr.mxu0 0.0
        %1982 = vmatpush2.msra.mxu0 0.0
        %1983 = vmatprep.subr.mxu0 0.0
        %1984 = vmatpush2.msra.mxu0 0.0
        %1985 = vmatprep.subr.mxu0 0.0
        %1986 = vmatpush2.msra.mxu0 0.0
        %1987 = vmatprep.subr.mxu0 0.0
        %1988 = vmatpush2.msra.mxu0 0.0
        %1989 = vmatprep.subr.mxu0 0.0
        %1990 = vmatpush2.msra.mxu0 0.0
        %1991 = vmatprep.subr.mxu0 0.0
        %1992 = vmatpush2.msra.mxu0 0.0
        %1993 = vmatprep.mubr.f32.mxu0 0.0
        %1994 = vmatmul.mubr.f32.gmra.mxu0 %v1918
        %v1995 = vpop.f32.mrf.mxu0
        %v1996 = vadd.f32 %v1899, %v1995
        %v1997 = vpop.f32.mrf.mxu0
        %1998 = vmatprep.mubr.f32.mxu0 0.0
        %1999 = vmatmul.mubr.f32.gmra.mxu0 %v1921
        %v2000 = vpop.f32.mrf.mxu0
        %v2001 = vadd.f32 %v1904, %v2000
        %v2002 = vpop.f32.mrf.mxu0
        %2003 = vmatprep.mubr.f32.mxu0 0.0
        %2004 = vmatmul.mubr.f32.gmra.mxu0 %v1924
        %v2005 = vpop.f32.mrf.mxu0
        %v2006 = vadd.f32 %v1909, %v2005
        %v2007 = vpop.f32.mrf.mxu0
        %2008 = vmatprep.mubr.f32.mxu0 0.0
        %2009 = vmatmul.mubr.f32.gmra.mxu0 %v1927
        %v2010 = vpop.f32.mrf.mxu0
        %v2011 = vadd.f32 %v1914, %v2010
        %v2012 = vpop.f32.mrf.mxu0
        %2013 = vdwg.mxu0
        %v2014 = vld [vmem:[#allocation5 + $0x3c0] ss:$0 sm:$0xff]
        %2016 = vrot.lane.b32.xlu0 %v2014, 12
        %v2017 = vpop.permute.xlu0 %2016
        %v2019 = vadd.f32 %v1996, %v2017
        %v2020 = vadd.f32 %v2001, %v2017
        %v2021 = vadd.f32 %v2006, %v2017
        %v2022 = vadd.f32 %v2011, %v2017
        %v2023 = vxor.u32 %v2019, 2147483648
        %v2024 = vxor.u32 %v2020, 2147483648
        %v2025 = vxor.u32 %v2021, 2147483648
        %v2026 = vxor.u32 %v2022, 2147483648
        %v2027 = vmul.f32 %v2023, 1.442695
        %v2028 = vpow.pop %v2027
        %v2029 = vmul.f32 %v2024, 1.442695
        %v2030 = vpow.pop %v2029
        %v2031 = vmul.f32 %v2025, 1.442695
        %v2032 = vpow.pop %v2031
        %v2033 = vmul.f32 %v2026, 1.442695
        %v2034 = vpow.pop %v2033
        %v2035 = vadd.f32 %v2028, 1.0
        %v2036 = vadd.f32 %v2030, 1.0
        %v2037 = vadd.f32 %v2032, 1.0
        %v2038 = vadd.f32 %v2034, 1.0
        %v2039 = vrcp.pop %v2035
        %v2040 = vmul.f32 1.0, %v2039
        %v2041 = vrcp.pop %v2036
        %v2042 = vmul.f32 1.0, %v2041
        %v2043 = vrcp.pop %v2037
        %v2044 = vmul.f32 1.0, %v2043
        %v2045 = vrcp.pop %v2038
        %v2046 = vmul.f32 1.0, %v2045
        %v2047 = vld [vmem:[#allocation5 + $0x3e0] sm:$0xff]
        %v2048 = vld [vmem:[#allocation5 + $0x3f0] sm:$0xff]
        %v2049 = vld [vmem:[#allocation5 + $0x400] sm:$0xff]
        %v2050 = vld [vmem:[#allocation5 + $0x410] sm:$0xff]
        %v2051 = vld [vmem:[#allocation5 + $0x420] sm:$0xff]
        %v2052 = vld [vmem:[#allocation5 + $0x430] sm:$0xff]
        %v2053 = vld [vmem:[#allocation5 + $0x440] sm:$0xff]
        %v2054 = vld [vmem:[#allocation5 + $0x450] sm:$0xff]
        %v2055 = vld [vmem:[#allocation5 + $0x460] sm:$0xff]
        %v2056 = vld [vmem:[#allocation5 + $0x470] sm:$0xff]
        %v2057 = vld [vmem:[#allocation5 + $0x480] sm:$0xff]
        %v2058 = vld [vmem:[#allocation5 + $0x490] sm:$0xff]
        %v2059 = vld [vmem:[#allocation5 + $0x4a0] sm:$0xff]
        %v2060 = vld [vmem:[#allocation5 + $0x4b0] sm:$0xff]
        %v2061 = vld [vmem:[#allocation5 + $0x4c0] sm:$0xff]
        %v2062 = vld [vmem:[#allocation5 + $0x4d0] sm:$0xff]
        %v2063 = vld [vmem:[#allocation5 + $0x4e0] sm:$0xff]
        %v2064 = vld [vmem:[#allocation5 + $0x4f0] sm:$0xff]
        %v2066 = vsel %vm460, %v1702, 0
        %v2069 = vsel %vm460, %v1708, 0
        %v2072 = vsel %vm460, %v1714, 0
        %v2075 = vsel %vm460, %v1720, 0
        %2077 = vmatprep.subr.mxu0 0.0
        %2078 = vmatpush1.msra.mxu0 %v2062
        %2079 = vmatprep.subr.mxu0 0.0
        %2080 = vmatpush1.msra.mxu0 %v2061
        %2081 = vmatprep.subr.mxu0 0.0
        %2082 = vmatpush1.msra.mxu0 %v2060
        %2083 = vmatprep.subr.mxu0 0.0
        %2084 = vmatpush1.msra.mxu0 %v2059
        %2085 = vmatprep.subr.mxu0 0.0
        %2086 = vmatpush1.msra.mxu0 %v2058
        %2087 = vmatprep.subr.mxu0 0.0
        %2088 = vmatpush1.msra.mxu0 %v2057
        %2089 = vmatprep.subr.mxu0 0.0
        %2090 = vmatpush1.msra.mxu0 %v2056
        %2091 = vmatprep.subr.mxu0 0.0
        %2092 = vmatpush1.msra.mxu0 %v2055
        %2093 = vmatprep.subr.mxu0 0.0
        %2094 = vmatpush1.msra.mxu0 %v2054
        %2095 = vmatprep.subr.mxu0 0.0
        %2096 = vmatpush1.msra.mxu0 %v2053
        %2097 = vmatprep.subr.mxu0 0.0
        %2098 = vmatpush1.msra.mxu0 %v2052
        %2099 = vmatprep.subr.mxu0 0.0
        %2100 = vmatpush1.msra.mxu0 %v2051
        %2101 = vmatprep.subr.mxu0 0.0
        %2102 = vmatpush1.msra.mxu0 %v2050
        %2103 = vmatprep.subr.mxu0 0.0
        %2104 = vmatpush1.msra.mxu0 %v2049
        %2105 = vmatprep.subr.mxu0 0.0
        %2106 = vmatpush1.msra.mxu0 %v2048
        %2107 = vmatprep.subr.mxu0 0.0
        %2108 = vmatpush1.msra.mxu0 %v2047
        %2109 = vmatprep.subr.mxu0 0.0
        %2110 = vmatpush2.msra.mxu0 0.0
        %2111 = vmatprep.subr.mxu0 0.0
        %2112 = vmatpush2.msra.mxu0 0.0
        %2113 = vmatprep.subr.mxu0 0.0
        %2114 = vmatpush2.msra.mxu0 0.0
        %2115 = vmatprep.subr.mxu0 0.0
        %2116 = vmatpush2.msra.mxu0 0.0
        %2117 = vmatprep.subr.mxu0 0.0
        %2118 = vmatpush2.msra.mxu0 0.0
        %2119 = vmatprep.subr.mxu0 0.0
        %2120 = vmatpush2.msra.mxu0 0.0
        %2121 = vmatprep.subr.mxu0 0.0
        %2122 = vmatpush2.msra.mxu0 0.0
        %2123 = vmatprep.subr.mxu0 0.0
        %2124 = vmatpush2.msra.mxu0 0.0
        %2125 = vmatprep.subr.mxu0 0.0
        %2126 = vmatpush2.msra.mxu0 0.0
        %2127 = vmatprep.subr.mxu0 0.0
        %2128 = vmatpush2.msra.mxu0 0.0
        %2129 = vmatprep.subr.mxu0 0.0
        %2130 = vmatpush2.msra.mxu0 0.0
        %2131 = vmatprep.subr.mxu0 0.0
        %2132 = vmatpush2.msra.mxu0 0.0
        %2133 = vmatprep.subr.mxu0 0.0
        %2134 = vmatpush2.msra.mxu0 0.0
        %2135 = vmatprep.subr.mxu0 0.0
        %2136 = vmatpush2.msra.mxu0 0.0
        %2137 = vmatprep.subr.mxu0 0.0
        %2138 = vmatpush2.msra.mxu0 %v2064
        %2139 = vmatprep.subr.mxu0 0.0
        %2140 = vmatpush2.msra.mxu0 %v2063
        %2141 = vmatprep.mubr.f32.mxu0 %v2066
        %2142 = vmatmul.mubr.f32.gmra.mxu0 %v1700
        %v2143 = vpop.f32.mrf.mxu0
        %v2144 = vadd.f32 0.0, %v2143
        %v2145 = vpop.f32.mrf.mxu0
        %2146 = vmatprep.mubr.f32.mxu0 %v2069
        %2147 = vmatmul.mubr.f32.gmra.mxu0 %v1706
        %v2148 = vpop.f32.mrf.mxu0
        %v2149 = vadd.f32 0.0, %v2148
        %v2150 = vpop.f32.mrf.mxu0
        %2151 = vmatprep.mubr.f32.mxu0 %v2072
        %2152 = vmatmul.mubr.f32.gmra.mxu0 %v1712
        %v2153 = vpop.f32.mrf.mxu0
        %v2154 = vadd.f32 0.0, %v2153
        %v2155 = vpop.f32.mrf.mxu0
        %2156 = vmatprep.mubr.f32.mxu0 %v2075
        %2157 = vmatmul.mubr.f32.gmra.mxu0 %v1718
        %v2158 = vpop.f32.mrf.mxu0
        %v2159 = vadd.f32 0.0, %v2158
        %v2160 = vpop.f32.mrf.mxu0
        %2161 = vdwg.mxu0
        %2166 = vrot.lane.b32.xlu0 %v2040, 116
        %v2167 = vpop.permute.xlu0 %2166
        %2168 = vrot.lane.b32.xlu0 %v2042, 116
        %v2169 = vpop.permute.xlu0 %2168
        %2170 = vrot.lane.b32.xlu0 %v2044, 116
        %v2171 = vpop.permute.xlu0 %2170
        %2172 = vrot.lane.b32.xlu0 %v2046, 116
        %v2173 = vpop.permute.xlu0 %2172
        %2178 = vrot.lane.b32.xlu0 %v2040, 124
        %v2179 = vpop.permute.xlu0 %2178
        %2180 = vrot.lane.b32.xlu0 %v2042, 124
        %v2181 = vpop.permute.xlu0 %2180
        %2182 = vrot.lane.b32.xlu0 %v2044, 124
        %v2183 = vpop.permute.xlu0 %2182
        %2184 = vrot.lane.b32.xlu0 %v2046, 124
        %v2185 = vpop.permute.xlu0 %2184
        %2190 = vrot.lane.b32.xlu0 %v2040, 4
        %v2191 = vpop.permute.xlu0 %2190
        %2192 = vrot.lane.b32.xlu0 %v2042, 4
        %v2193 = vpop.permute.xlu0 %2192
        %2194 = vrot.lane.b32.xlu0 %v2044, 4
        %v2195 = vpop.permute.xlu0 %2194
        %2196 = vrot.lane.b32.xlu0 %v2046, 4
        %v2197 = vpop.permute.xlu0 %2196
        %vm2202 = vcmask 64512
        %v2203 = vsel %vm2202, %v2167, %v2179
        %v2204 = vsel %vm2202, %v2169, %v2181
        %v2205 = vsel %vm2202, %v2171, %v2183
        %v2206 = vsel %vm2202, %v2173, %v2185
        %v2207 = vsel %vm460, %v2203, %v2191
        %v2208 = vsel %vm460, %v2204, %v2193
        %v2209 = vsel %vm460, %v2205, %v2195
        %v2210 = vsel %vm460, %v2206, %v2197
        %v2211 = vmul.f32 %v2144, %v2207
        %v2212 = vmul.f32 %v2149, %v2208
        %v2213 = vmul.f32 %v2154, %v2209
        %v2214 = vmul.f32 %v2159, %v2210
        %v2215 = vlaneseq
        %v2216 = vand.u32 %v2215, 127
        %vm2217 = vcmp.lt.s32.totalorder %v2216, 0
        %v2218 = vsub.s32 0, %v2216
        %v2219 = vsel %vm2217, %v2218, %v2216
        %v2220 = vshrl.u32 %v2219, 3
        %v2221 = vand.u32 %v2219, 7
        %v2222 = vsub.s32 0, %v2221
        %v2223 = vsel %vm2217, %v2222, %v2221
        %vm2224 = vcmp.ne.s32.totalorder %v2223, 0
        %vm2225 = vcmp.lt.s32.totalorder %v2223, 0
        %vm2226 = vmand %vm2225, %vm2224
        %v2227 = vadd.s32 %v2223, 8
        %v2228 = vsel %vm2226, %v2227, %v2223
        %vm2229 = vcmp.ge.s32.totalorder %v2228, 4
        %v2230 = vmul.f32 %v2211, 1.442695
        %v2231 = vpow.pop %v2230
        %v2232 = vmul.f32 %v2212, 1.442695
        %v2233 = vpow.pop %v2232
        %v2234 = vmul.f32 %v2213, 1.442695
        %v2235 = vpow.pop %v2234
        %v2236 = vmul.f32 %v2214, 1.442695
        %v2237 = vpow.pop %v2236
        %v2238 = vsel %vm2229, %v2231, %v2211
        %v2239 = vsel %vm2229, %v2233, %v2212
        %v2240 = vsel %vm2229, %v2235, %v2213
        %v2241 = vsel %vm2229, %v2237, %v2214
        %vm2242 = vcmask 97344
        %v2243 = vsel %vm2242, %v1996, -inf
        %2244 = vmax.xlane.f32.xlu0 %v2243
        %v2245 = vpop.xlane.xlu0 %2244
        %v2246 = vsel %vm2242, %v2001, -inf
        %2247 = vmax.xlane.f32.xlu0 %v2246
        %v2248 = vpop.xlane.xlu0 %2247
        %v2249 = vsel %vm2242, %v2006, -inf
        %2250 = vmax.xlane.f32.xlu0 %v2249
        %v2251 = vpop.xlane.xlu0 %2250
        %v2252 = vsel %vm2242, %v2011, -inf
        %2253 = vmax.xlane.f32.xlu0 %v2252
        %v2254 = vpop.xlane.xlu0 %2253
        %v2255 = vsub.f32 %v1996, %v2245
        %v2256 = vsub.f32 %v2001, %v2248
        %v2257 = vsub.f32 %v2006, %v2251
        %v2258 = vsub.f32 %v2011, %v2254
        %v2259 = vmul.f32 %v2255, 1.442695
        %v2260 = vpow.pop %v2259
        %v2261 = vmul.f32 %v2256, 1.442695
        %v2262 = vpow.pop %v2261
        %v2263 = vmul.f32 %v2257, 1.442695
        %v2264 = vpow.pop %v2263
        %v2265 = vmul.f32 %v2258, 1.442695
        %v2266 = vpow.pop %v2265
        %2271 = vrot.lane.b32.xlu0 %v2260, 120
        %v2272 = vpop.permute.xlu0 %2271
        %2273 = vrot.lane.b32.xlu0 %v2262, 120
        %v2274 = vpop.permute.xlu0 %2273
        %2275 = vrot.lane.b32.xlu0 %v2264, 120
        %v2276 = vpop.permute.xlu0 %2275
        %2277 = vrot.lane.b32.xlu0 %v2266, 120
        %v2278 = vpop.permute.xlu0 %2277
        %vm2283 = vcmask 31744
        %v2284 = vsel %vm2283, %v2272, 0.0
        %2285 = vadd.xlane.f32.xlu0 %v2284
        %v2286 = vpop.xlane.xlu0 %2285
        %v2287 = vsel %vm2283, %v2274, 0.0
        %2288 = vadd.xlane.f32.xlu0 %v2287
        %v2289 = vpop.xlane.xlu0 %2288
        %v2290 = vsel %vm2283, %v2276, 0.0
        %2291 = vadd.xlane.f32.xlu0 %v2290
        %v2292 = vpop.xlane.xlu0 %2291
        %v2293 = vsel %vm2283, %v2278, 0.0
        %2294 = vadd.xlane.f32.xlu0 %v2293
        %v2295 = vpop.xlane.xlu0 %2294
        %v2296 = vrcp.pop %v2286
        %v2297 = vmul.f32 %v2260, %v2296
        %v2298 = vrcp.pop %v2289
        %v2299 = vmul.f32 %v2262, %v2298
        %v2300 = vrcp.pop %v2292
        %v2301 = vmul.f32 %v2264, %v2300
        %v2302 = vrcp.pop %v2295
        %v2303 = vmul.f32 %v2266, %v2302
        %2308 = vrot.lane.b32.xlu0 %v2297, 16
        %v2309 = vpop.permute.xlu0 %2308
        %2310 = vrot.lane.b32.xlu0 %v2299, 16
        %v2311 = vpop.permute.xlu0 %2310
        %2312 = vrot.lane.b32.xlu0 %v2301, 16
        %v2313 = vpop.permute.xlu0 %2312
        %2314 = vrot.lane.b32.xlu0 %v2303, 16
        %v2315 = vpop.permute.xlu0 %2314
        %v2320 = vsel %vm198, %v2238, %v2309
        %v2321 = vsel %vm198, %v2239, %v2311
        %v2322 = vsel %vm198, %v2240, %v2313
        %v2323 = vsel %vm198, %v2241, %v2315
        %vm2324 = vcmask 228352
        %v2325 = vsel %vm2324, %v2320, 0.0
        %v2326 = vsel %vm2324, %v2321, 0.0
        %v2327 = vsel %vm2324, %v2322, 0.0
        %v2328 = vsel %vm2324, %v2323, 0.0
        %2329 = vst [vmem:[%s176] sm:$0xff] %v2325
        %2330 = vst [vmem:[%s176 + $0x8] sm:$0xff] %v2326
        %2331 = vst [vmem:[%s176 + $0x10] sm:$0xff] %v2327
        %2332 = vst [vmem:[%s176 + $0x18] sm:$0xff] %v2328
        %s2333 = sand.u32 %s75, 1
        %s2334 = scalar_lea.sflag [#allocation4], %s2333
        %s2335 = sand.u32 %s75, 1
        %s2336 = smul.addr %s2335, 32
        %s2337 = scalar_lea.vmem [#allocation7], %s2336
        // Predicated region
        $region37: #{tpu_custom_call.1} parent=27 // pred_check
          %p2338 = pneg %p85
        $region38: #{tpu_custom_call.1} parent=27 // pred_check_branch
          %2340 = sbr.rel (%p2338) target = $region40
        $region39: #{tpu_custom_call.1} parent=27 // pred_region
          %s2341 = smul.u32 4, %s20
          %s2343 = ssub.s32 512, 512
          %2344 = vsyncadd %s2334, %s2343
          %s2345 = smul.addr %s2341, 128
          %s2346 = scalar_lea.hbm %s2, %s2345
          %s2347 = sshll.u32 %s2337, 4
          %s2348 = int_to_ptr.vmem [resolvable:$true] %s2347
          %2353 = dma.vmem_to_hbm [thread:$0]  %s2348, 512, %s2346, %s2334, 128, 128, 8
        $region40: #{tpu_custom_call.1} parent=27 // pred_fallthru
          _
      $region28: #{tpu_custom_call.1} parent=5 // pred_fallthru
        _
      %p2354 = scmp.le.s32.totalorder 2, %s15
      // Predicated region
      $region41: #{tpu_custom_call.1} parent=5 // pred_check
        %p2355 = pneg %p2354
      $region42: #{tpu_custom_call.1} parent=5 // pred_check_branch
        %2357 = sbr.rel (%p2355) target = $region44
      $region43: #{tpu_custom_call.1} parent=5 // pred_region
        %s2358 = ssub.s32 %s15, 2
        // Predicated region
        $region45: #{tpu_custom_call.1} parent=43 // pred_check
          %p2359 = pneg %p91
        $region46: #{tpu_custom_call.1} parent=43 // pred_check_branch
          %2361 = sbr.rel (%p2359) target = $region48
        $region47: #{tpu_custom_call.1} parent=43 // pred_region
          %s2362 = sand.u32 %s76, 1
          %s2363 = scalar_lea.sflag [#allocation4], %s2362
          %s2364 = sand.u32 %s76, 1
          %s2365 = smul.addr %s2364, 32
          %s2366 = scalar_lea.vmem [#allocation7], %s2365
          %2367 = dma.done %s2363, 512
        $region48: #{tpu_custom_call.1} parent=43 // pred_fallthru
          _
      $region44: #{tpu_custom_call.1} parent=5 // pred_fallthru
        _
    $region6: #{tpu_custom_call.1} parent=1 // loop_footer
      %s19 = sadd.s32 1, %s15
    $region7: #{tpu_custom_call.1} parent=1 // loop_footer_branch
      %14 = sbr.rel target = $region3
    $region8: #{tpu_custom_call.1} parent=1 // loop_exit
      _
    %2368 = vsyncpa [#allocation3], 1
    %s2369 = scalar_lea.sflag [#allocation3], 1
    %2370 = vsyncpa %s2369, 1
    %2371 = vsyncpa [#allocation6], 1
    %2372 = vsyncpa [#allocation4], 1
    %s2373 = scalar_lea.sflag [#allocation4], 1
    %2374 = vsyncpa %s2373, 1

</llo_original>
